<compile_context>
chip_gen: v6e
topology: v6e:2x2x1
jax: 0.10.0
libtpu: 0.0.40
codegen_flags: <defaults>
</compile_context>

<pallas_src>
import functools

import jax
import jax.numpy as jnp
from jax.experimental import pallas as pl
from jax.experimental.pallas import tpu as pltpu

EPS = 1e-5  # nn.BatchNorm2d default


# --------------------------------------------------------------------------
# small helpers
# --------------------------------------------------------------------------
def _vmem_limit_bytes():
    # Size the scoped-VMEM limit per generation; leave headroom on v7x (64 MiB).
    try:
        cap = getattr(pltpu.get_tpu_info(), "vmem_capacity_bytes", None)
        if cap:
            return int(min(cap * 3 // 4, 48 * 1024 * 1024))
    except Exception:
        pass
    return 32 * 1024 * 1024


def _compiler_params():
    return pltpu.CompilerParams(vmem_limit_bytes=_vmem_limit_bytes())


def _vmem_spec():
    return pl.BlockSpec(memory_space=pltpu.MemorySpace.VMEM)


def _pack_conv(w):
    # torch OIHW (Cout, Cin, kh, kw) -> (Cout, kh*kw*Cin) bf16,
    # column order (ky*kw + kx)*Cin + cin, matching the im2col row order.
    co, ci, kh, kw = w.shape
    return jnp.transpose(w, (0, 2, 3, 1)).reshape(co, kh * kw * ci).astype(jnp.bfloat16)


def _bn_relu(h, gamma, beta, *, relu):
    # Training-mode BatchNorm2d over (N, H, W) per channel; h is (C, N*H*W) f32.
    # Shifted (two-pass) statistics avoid E[x^2]-E[x]^2 cancellation.
    inv_cnt = 1.0 / h.shape[1]
    mean = jnp.sum(h, axis=1, keepdims=True) * inv_cnt
    d = h - mean
    var = jnp.sum(d * d, axis=1, keepdims=True) * inv_cnt
    out = d * (jax.lax.rsqrt(var + EPS) * gamma) + beta
    return jnp.maximum(out, 0.0) if relu else out


# --------------------------------------------------------------------------
# kernels
# --------------------------------------------------------------------------
def _stem_kernel(p_ref, w_ref, g_ref, b_ref, o_ref):
    # conv1 (as a single (Cout, 49*Cin) x (49*Cin, N*Ho*Wo) MXU matmul,
    # bf16 operands / f32 accumulation) -> bn1 (batch stats) -> relu.
    h = jnp.dot(w_ref[...], p_ref[...], preferred_element_type=jnp.float32)
    o_ref[...] = _bn_relu(h, g_ref[...], b_ref[...], relu=True)


def _block_kernel(x_ref, w1_ref, w2_ref, g1_ref, b1_ref, g2_ref, b2_ref,
                  o_ref, col_ref, *, h_sp, w_sp):
    C, L = o_ref.shape
    hw = h_sp * w_sp

    # Fused prologue: max-reduce the leading "tap" axis. T == 9 carries the
    # 3x3/stride-2 max-pool windows for the first block; T == 1 is a plain pass.
    x = x_ref[0]
    for t in range(1, x_ref.shape[0]):
        x = jnp.maximum(x, x_ref[t])

    # Halo masks / roll shifts for the 3x3 taps, computed ONCE and reused by
    # both convs. Columns are (n, y, x) flattened, so masks are periodic in hw;
    # they also kill anything a batched roll drags across a sample boundary
    # (those positions are exactly the out-of-image halo).
    q = jax.lax.broadcasted_iota(jnp.int32, (1, L), 1) % hw
    row = q // w_sp
    col = q % w_sp
    row_ok = (row >= 1, None, row <= h_sp - 2)
    col_ok = (col >= 1, None, col <= w_sp - 2)

    def fill_im2col(src_bf16):
        # Stage the 9 shifted taps into the persistent (9*C, L) bf16 scratch.
        for k in range(9):
            ky, kx = divmod(k, 3)
            d = (ky - 1) * w_sp + (kx - 1)
            t = src_bf16 if d == 0 else pltpu.roll(src_bf16, shift=(-d) % L, axis=1)
            mask = None
            for m in (row_ok[ky], col_ok[kx]):
                if m is not None:
                    mask = m if mask is None else jnp.logical_and(mask, m)
            if mask is not None:
                t = jnp.where(mask, t, jnp.zeros_like(t))
            col_ref[pl.ds(k * C, C), :] = t

    # conv1 -> bn1 -> relu
    fill_im2col(x.astype(jnp.bfloat16))
    h = jnp.dot(w1_ref[...], col_ref[...], preferred_element_type=jnp.float32)
    h = _bn_relu(h, g1_ref[...], b1_ref[...], relu=True)

    # conv2 -> bn2 -> (+identity) -> relu
    fill_im2col(h.astype(jnp.bfloat16))
    h = jnp.dot(w2_ref[...], col_ref[...], preferred_element_type=jnp.float32)
    h = _bn_relu(h, g2_ref[...], b2_ref[...], relu=False)
    o_ref[...] = jnp.maximum(h + x, 0.0)


# --------------------------------------------------------------------------
# wrappers
# --------------------------------------------------------------------------
def _stem(x, w, gamma, beta):
    # conv1 7x7 / stride 2 / pad 3 (bias-free) -> bn1 -> relu.
    n, ci, h, w_sp = x.shape
    co = w.shape[0]
    ho, wo = h // 2, w_sp // 2
    xp = jnp.pad(x, ((0, 0), (0, 0), (3, 3), (3, 3)))
    # TODO(synk): stride-2 patch extraction is wrapper-side layout plumbing.
    taps = [xp[:, :, ky:ky + 2 * ho:2, kx:kx + 2 * wo:2]
            for ky in range(7) for kx in range(7)]
    patches = jnp.concatenate(taps, axis=1)                        # (N, 49*Ci, Ho, Wo)
    patches = jnp.transpose(patches, (1, 0, 2, 3)).reshape(49 * ci, n * ho * wo)
    patches = patches.astype(jnp.bfloat16)

    l = n * ho * wo
    cost = pl.CostEstimate(flops=int(2 * co * 49 * ci * l + 10 * co * l),
                           transcendentals=int(co),
                           bytes_accessed=int(2 * patches.size + 4 * co * l))
    out = pl.pallas_call(
        _stem_kernel,
        out_shape=jax.ShapeDtypeStruct((co, l), jnp.float32),
        in_specs=[_vmem_spec()] * 4,
        out_specs=_vmem_spec(),
        compiler_params=_compiler_params(),
        cost_estimate=cost,
    )(patches, _pack_conv(w),
      gamma.reshape(co, 1).astype(jnp.float32),
      beta.reshape(co, 1).astype(jnp.float32))
    return out, (n, co, ho, wo)


def _maxpool_taps(s_flat, n, c, h, w_sp):
    # 3x3 / stride-2 / pad-1 window views; zero padding is exact because the
    # input is post-ReLU (>= 0). The max itself is fused into the next kernel.
    ho, wo = h // 2, w_sp // 2
    s = s_flat.reshape(c, n, h, w_sp)
    sp = jnp.pad(s, ((0, 0), (0, 0), (1, 1), (1, 1)))
    taps = [sp[:, :, dy:dy + 2 * ho:2, dx:dx + 2 * wo:2]
            for dy in range(3) for dx in range(3)]
    return jnp.stack(taps, axis=0).reshape(9, c, n * ho * wo), ho, wo


def _basic_block(x_taps, p, h_sp, w_sp):
    t, c, l = x_taps.shape
    cost = pl.CostEstimate(flops=int(2 * (2 * c * 9 * c * l) + 30 * c * l),
                           transcendentals=int(2 * c),
                           bytes_accessed=int(4 * (t + 1) * c * l + 4 * c * 9 * c))
    return pl.pallas_call(
        functools.partial(_block_kernel, h_sp=h_sp, w_sp=w_sp),
        out_shape=jax.ShapeDtypeStruct((c, l), jnp.float32),
        in_specs=[_vmem_spec()] * 7,
        out_specs=_vmem_spec(),
        scratch_shapes=[pltpu.VMEM((9 * c, l), jnp.bfloat16)],
        compiler_params=_compiler_params(),
        cost_estimate=cost,
    )(x_taps, _pack_conv(p["w1"]), _pack_conv(p["w2"]),
      p["g1"].reshape(c, 1), p["b1"].reshape(c, 1),
      p["g2"].reshape(c, 1), p["b2"].reshape(c, 1))


def resnet18_encoder_forward(x, params):
    """Resnet18Encoder(out_layer=1): (N, 3, H, W) f32 -> (N, 64, H/4, W/4) f32."""
    s, (n, c, h, w_sp) = _stem(x, params["conv1_w"], params["bn1_g"], params["bn1_b"])
    taps, h, w_sp = _maxpool_taps(s, n, c, h, w_sp)
    out = _basic_block(taps, params["layer1_0"], h, w_sp)
    out = _basic_block(out[None], params["layer1_1"], h, w_sp)
    return jnp.transpose(out.reshape(c, n, h, w_sp), (1, 0, 2, 3))


# --------------------------------------------------------------------------
# pure-JAX f32 reference
# --------------------------------------------------------------------------
def resnet18_encoder_reference(x, params):
    def conv(h, w, stride, pad):
        return jax.lax.conv_general_dilated(
            h, w, (stride, stride), [(pad, pad), (pad, pad)],
            dimension_numbers=("NCHW", "OIHW", "NCHW"))

    def bn(h, g, b):
        m = jnp.mean(h, axis=(0, 2, 3), keepdims=True)
        v = jnp.mean((h - m) ** 2, axis=(0, 2, 3), keepdims=True)
        return ((h - m) * jax.lax.rsqrt(v + EPS) * g.reshape(1, -1, 1, 1)
                + b.reshape(1, -1, 1, 1))

    h = jnp.maximum(bn(conv(x, params["conv1_w"], 2, 3),
                       params["bn1_g"], params["bn1_b"]), 0.0)
    h = jax.lax.reduce_window(h, -jnp.inf, jax.lax.max,
                              (1, 1, 3, 3), (1, 1, 2, 2),
                              [(0, 0), (0, 0), (1, 1), (1, 1)])
    for name in ("layer1_0", "layer1_1"):
        p = params[name]
        idn = h
        h = jnp.maximum(bn(conv(h, p["w1"], 1, 1), p["g1"], p["b1"]), 0.0)
        h = bn(conv(h, p["w2"], 1, 1), p["g2"], p["b2"])
        h = jnp.maximum(h + idn, 0.0)
    return h


def init_params(key):
    c = 64
    ks = jax.random.split(key, 15)

    def conv_w(k, co, ci, kh, kw):
        fan_in = ci * kh * kw
        return (jax.random.normal(k, (co, ci, kh, kw), jnp.float32)
                / jnp.sqrt(fan_in)).astype(jnp.float32)

    def bn_p(kg, kb):
        return (1.0 + 0.1 * jax.random.normal(kg, (c,), jnp.float32),
                0.1 * jax.random.normal(kb, (c,), jnp.float32))

    params = {"conv1_w": conv_w(ks[0], c, 3, 7, 7)}
    params["bn1_g"], params["bn1_b"] = bn_p(ks[1], ks[2])
    i = 3
    for name in ("layer1_0", "layer1_1"):
        w1 = conv_w(ks[i], c, c, 3, 3)
        w2 = conv_w(ks[i + 1], c, c, 3, 3)
        g1, b1 = bn_p(ks[i + 2], ks[i + 3])
        g2, b2 = bn_p(ks[i + 4], ks[i + 5])
        params[name] = dict(w1=w1, w2=w2, g1=g1, b1=b1, g2=g2, b2=b2)
        i += 6
    return params


if __name__ == "__main__":
    # Small shapes consistent with the module: batch=2, 3 input channels,
    # 64x64 spatial (-> 64-channel, 16x16 output after stem+pool+layer1).
    n, ci, h, w = 2, 3, 64, 64
    key = jax.random.PRNGKey(0)
    kx, kp = jax.random.split(key)
    x = jax.random.normal(kx, (n, ci, h, w), jnp.float32)
    params = init_params(kp)

    out = jax.block_until_ready(resnet18_encoder_forward(x, params))
    ref = resnet18_encoder_reference(x, params)

    assert out.shape == (n, 64, h // 4, w // 4), out.shape
    err = float(jnp.max(jnp.abs(out - ref)))
    # bf16 MXU operands (f32 accumulation, f32 BN stats) vs. a pure-f32 reference.
    assert jnp.allclose(out, ref, rtol=5e-2, atol=5e-2), f"max abs err {err}"
    print("KERNEL_OK")
</pallas_src>

<mosaic_0001>
module attributes {stable_mosaic.version = 11 : i64} {
  func.func @_stem_kernel(%arg0: memref<147x2048xbf16, #tpu.memory_space<vmem>>, %arg1: memref<64x147xbf16, #tpu.memory_space<vmem>>, %arg2: memref<64x1xf32, #tpu.memory_space<vmem>>, %arg3: memref<64x1xf32, #tpu.memory_space<vmem>>, %arg4: memref<64x2048xf32, #tpu.memory_space<vmem>>) attributes {dimension_semantics = [], scalar_prefetch = 0 : i64, scratch_operands = 0 : i64, tpu.core_type = #tpu.core_type<tc>} {
    %c0 = arith.constant 0 : index
    %c0_0 = arith.constant 0 : index
    %0 = vector.load %arg1[%c0, %c0_0] : memref<64x147xbf16, #tpu.memory_space<vmem>>, vector<64x147xbf16>
    %c0_1 = arith.constant 0 : index
    %c0_2 = arith.constant 0 : index
    %1 = vector.load %arg0[%c0_1, %c0_2] : memref<147x2048xbf16, #tpu.memory_space<vmem>>, vector<147x2048xbf16>
    %cst = arith.constant dense<0.000000e+00> : vector<64x2048xf32>
    %2 = tpu.matmul %0, %1, %cst {dimension_numbers = #tpu.dot_dimension_numbers<[1], [0], [0], [1], [0, 0, 1, 1], [], []>} : vector<64x147xbf16>, vector<147x2048xbf16>, vector<64x2048xf32> -> vector<64x2048xf32>
    %c0_3 = arith.constant 0 : index
    %c0_4 = arith.constant 0 : index
    %3 = vector.load %arg2[%c0_3, %c0_4] : memref<64x1xf32, #tpu.memory_space<vmem>>, vector<64x1xf32>
    %c0_5 = arith.constant 0 : index
    %c0_6 = arith.constant 0 : index
    %4 = vector.load %arg3[%c0_5, %c0_6] : memref<64x1xf32, #tpu.memory_space<vmem>>, vector<64x1xf32>
    %cst_7 = arith.constant dense<0.000000e+00> : vector<64xf32>
    %5 = vector.multi_reduction <add>, %2, %cst_7 [1] : vector<64x2048xf32> to vector<64xf32>
    %6 = vector.shape_cast %5 : vector<64xf32> to vector<64x1xf32>
    %cst_8 = arith.constant 4.8828125E-4 : f32
    %7 = vector.broadcast %cst_8 : f32 to vector<64x1xf32>
    %8 = arith.mulf %6, %7 : vector<64x1xf32>
    %9 = vector.broadcast %8 : vector<64x1xf32> to vector<64x2048xf32>
    %10 = arith.subf %2, %9 : vector<64x2048xf32>
    %11 = arith.mulf %10, %10 : vector<64x2048xf32>
    %cst_9 = arith.constant dense<0.000000e+00> : vector<64xf32>
    %12 = vector.multi_reduction <add>, %11, %cst_9 [1] : vector<64x2048xf32> to vector<64xf32>
    %13 = vector.shape_cast %12 : vector<64xf32> to vector<64x1xf32>
    %cst_10 = arith.constant 4.8828125E-4 : f32
    %14 = vector.broadcast %cst_10 : f32 to vector<64x1xf32>
    %15 = arith.mulf %13, %14 : vector<64x1xf32>
    %cst_11 = arith.constant 9.99999974E-6 : f32
    %16 = vector.broadcast %cst_11 : f32 to vector<64x1xf32>
    %17 = arith.addf %15, %16 : vector<64x1xf32>
    %18 = math.rsqrt %17 : vector<64x1xf32>
    %19 = arith.mulf %18, %3 : vector<64x1xf32>
    %20 = vector.broadcast %19 : vector<64x1xf32> to vector<64x2048xf32>
    %21 = arith.mulf %10, %20 : vector<64x2048xf32>
    %22 = vector.broadcast %4 : vector<64x1xf32> to vector<64x2048xf32>
    %23 = arith.addf %21, %22 : vector<64x2048xf32>
    %cst_12 = arith.constant 0.000000e+00 : f32
    %24 = vector.broadcast %cst_12 : f32 to vector<64x2048xf32>
    %25 = arith.maximumf %23, %24 : vector<64x2048xf32>
    %c0_13 = arith.constant 0 : index
    %c0_14 = arith.constant 0 : index
    %26 = vector.load %arg4[%c0_13, %c0_14] : memref<64x2048xf32, #tpu.memory_space<vmem>>, vector<64x2048xf32>
    tpu.vector_store %arg4[%c0_13, %c0_14], %25 {strides = array<i32>} : memref<64x2048xf32, #tpu.memory_space<vmem>>, vector<64x2048xf32>,
    return
  }
}

</mosaic_0001>

<llo_original>
// kernel: tpu_custom_call.1
$region0: #{tpu_custom_call.1}
  #allocation0 [shape = 'u32[]', space=smem, size = 0x4, offset = 0x4, fixed_abs, tag = 'smem constant byte address 0x4 - core index']
  #allocation1 [shape = 'u32[144,128]{1,0:T(1,128)}', space=vmem, size = 0x12000, scoped, tag = 'internal scratch']
  %s0 = inlined_call_operand.hbm [shape: bf16[147,2048], index: 0, kind: input, shape index: {}]
  %s1 = inlined_call_operand.vmem [shape: bf16[64,147], index: 1, kind: input, shape index: {}]
  %s2 = inlined_call_operand.vmem [shape: f32[64,1], index: 2, kind: input, shape index: {}]
  %s3 = inlined_call_operand.vmem [shape: f32[64,1], index: 3, kind: input, shape index: {}]
  %s4 = inlined_call_operand.hbm [shape: f32[64,2048], index: 4, kind: output, shape index: {}]
  %s5 = sld [smem:[#allocation0]]
  $region30: #{tpu_custom_call.1} parent=0
    _
  %s7 = ssub.s32 1, %s5
  %s8 = scalar_select 0, %s7, %s5
  $region1: #{tpu_custom_call.1} parent=0
    #allocation2 [shape = 'u8[622592]{0}', space=vmem, size = 0x98000, scoped, tag = 'input window, operand 0, single buffered']
    #allocation3 [shape = 's32[1]{0}', space=sflag, size = 0x4, scoped, tag = 'scoped memory for tpu_custom_call.1']
    #allocation4 [shape = 's32[1]{0}', space=sflag, size = 0x4, scoped, tag = 'scoped memory for tpu_custom_call.1']
    #allocation5 [shape = 'u8[524288]{0}', space=vmem, size = 0x80000, scoped, tag = 'output window, operand 0, single buffered']
    %9 = vsyncpa [#allocation3], 0
    %10 = vsyncpa [#allocation4], 0
    // Predicated region
    $region2: #{tpu_custom_call.1} parent=1 // pred_check
      _
    $region3: #{tpu_custom_call.1} parent=1 // pred_check_branch
      %12 = sbr.rel (0) target = $region5
    $region4: #{tpu_custom_call.1} parent=1 // pred_region
      %s14 = ssub.s32 19456, 19456
      %15 = vsyncadd [#allocation3], %s14
      %s16 = sshll.u32 [#allocation2], 4
      %s17 = int_to_ptr.vmem [resolvable:$true] %s16
      %22 = dma.hbm_to_vmem [thread:$0]  %s0, 19456, %s17, [#allocation3], 1024, 1024, 64
    $region5: #{tpu_custom_call.1} parent=1 // pred_fallthru
      _
    // Predicated region
    $region6: #{tpu_custom_call.1} parent=1 // pred_check
      _
    $region7: #{tpu_custom_call.1} parent=1 // pred_check_branch
      %24 = sbr.rel (0) target = $region9
    $region8: #{tpu_custom_call.1} parent=1 // pred_region
      _
    $region9: #{tpu_custom_call.1} parent=1 // pred_fallthru
      _
    // Predicated region
    $region10: #{tpu_custom_call.1} parent=1 // pred_check
      _
    $region11: #{tpu_custom_call.1} parent=1 // pred_check_branch
      %26 = sbr.rel (0) target = $region13
    $region12: #{tpu_custom_call.1} parent=1 // pred_region
      _
    $region13: #{tpu_custom_call.1} parent=1 // pred_fallthru
      _
    // Predicated region
    $region14: #{tpu_custom_call.1} parent=1 // pred_check
      _
    $region15: #{tpu_custom_call.1} parent=1 // pred_check_branch
      %28 = sbr.rel (0) target = $region17
    $region16: #{tpu_custom_call.1} parent=1 // pred_region
      _
    $region17: #{tpu_custom_call.1} parent=1 // pred_fallthru
      _
    // Predicated region
    $region18: #{tpu_custom_call.1} parent=1 // pred_check
      _
    $region19: #{tpu_custom_call.1} parent=1 // pred_check_branch
      %30 = sbr.rel (0) target = $region21
    $region20: #{tpu_custom_call.1} parent=1 // pred_region
      %31 = dma.done [#allocation3], 19456
    $region21: #{tpu_custom_call.1} parent=1 // pred_fallthru
      _
    %v33 = vld [vmem:[%s1] sm:$0xff]
    %v34 = vld [vmem:[%s1 + $0x8] sm:$0xff]
    %v35 = vld [vmem:[%s1 + $0x10] sm:$0xff]
    %v36 = vld [vmem:[%s1 + $0x18] sm:$0xff]
    %v37 = vld [vmem:[%s1 + $0x20] sm:$0xff]
    %v38 = vld [vmem:[%s1 + $0x28] sm:$0xff]
    %v39 = vld [vmem:[%s1 + $0x30] sm:$0xff]
    %v40 = vld [vmem:[%s1 + $0x38] sm:$0xff]
    %v41 = vld [vmem:[#allocation2] sm:$0xff]
    %v42 = vld [vmem:[#allocation2 + $0x8] sm:$0xff]
    %v43 = vld [vmem:[#allocation2 + $0x10] sm:$0xff]
    %v44 = vld [vmem:[#allocation2 + $0x18] sm:$0xff]
    %v45 = vld [vmem:[#allocation2 + $0x20] sm:$0xff]
    %v46 = vld [vmem:[#allocation2 + $0x28] sm:$0xff]
    %v47 = vld [vmem:[#allocation2 + $0x30] sm:$0xff]
    %v48 = vld [vmem:[#allocation2 + $0x38] sm:$0xff]
    %v49 = vld [vmem:[#allocation2 + $0x40] sm:$0xff]
    %v50 = vld [vmem:[#allocation2 + $0x48] sm:$0xff]
    %v51 = vld [vmem:[#allocation2 + $0x50] sm:$0xff]
    %v52 = vld [vmem:[#allocation2 + $0x58] sm:$0xff]
    %v53 = vld [vmem:[#allocation2 + $0x60] sm:$0xff]
    %v54 = vld [vmem:[#allocation2 + $0x68] sm:$0xff]
    %v55 = vld [vmem:[#allocation2 + $0x70] sm:$0xff]
    %v56 = vld [vmem:[#allocation2 + $0x78] sm:$0xff]
    %v57 = vld [vmem:[#allocation2 + $0x80] sm:$0xff]
    %v58 = vld [vmem:[#allocation2 + $0x88] sm:$0xff]
    %v59 = vld [vmem:[#allocation2 + $0x90] sm:$0xff]
    %v60 = vld [vmem:[#allocation2 + $0x98] sm:$0xff]
    %v61 = vld [vmem:[#allocation2 + $0xa0] sm:$0xff]
    %v62 = vld [vmem:[#allocation2 + $0xa8] sm:$0xff]
    %v63 = vld [vmem:[#allocation2 + $0xb0] sm:$0xff]
    %v64 = vld [vmem:[#allocation2 + $0xb8] sm:$0xff]
    %v65 = vld [vmem:[#allocation2 + $0xc0] sm:$0xff]
    %v66 = vld [vmem:[#allocation2 + $0xc8] sm:$0xff]
    %v67 = vld [vmem:[#allocation2 + $0xd0] sm:$0xff]
    %v68 = vld [vmem:[#allocation2 + $0xd8] sm:$0xff]
    %v69 = vld [vmem:[#allocation2 + $0xe0] sm:$0xff]
    %v70 = vld [vmem:[#allocation2 + $0xe8] sm:$0xff]
    %v71 = vld [vmem:[#allocation2 + $0xf0] sm:$0xff]
    %v72 = vld [vmem:[#allocation2 + $0xf8] sm:$0xff]
    %v73 = vld [vmem:[#allocation2 + $0x100] sm:$0xff]
    %v74 = vld [vmem:[#allocation2 + $0x108] sm:$0xff]
    %v75 = vld [vmem:[#allocation2 + $0x110] sm:$0xff]
    %v76 = vld [vmem:[#allocation2 + $0x118] sm:$0xff]
    %v77 = vld [vmem:[#allocation2 + $0x120] sm:$0xff]
    %v78 = vld [vmem:[#allocation2 + $0x128] sm:$0xff]
    %v79 = vld [vmem:[#allocation2 + $0x130] sm:$0xff]
    %v80 = vld [vmem:[#allocation2 + $0x138] sm:$0xff]
    %v81 = vld [vmem:[#allocation2 + $0x140] sm:$0xff]
    %v82 = vld [vmem:[#allocation2 + $0x148] sm:$0xff]
    %v83 = vld [vmem:[#allocation2 + $0x150] sm:$0xff]
    %v84 = vld [vmem:[#allocation2 + $0x158] sm:$0xff]
    %v85 = vld [vmem:[#allocation2 + $0x160] sm:$0xff]
    %v86 = vld [vmem:[#allocation2 + $0x168] sm:$0xff]
    %v87 = vld [vmem:[#allocation2 + $0x170] sm:$0xff]
    %v88 = vld [vmem:[#allocation2 + $0x178] sm:$0xff]
    %v89 = vld [vmem:[#allocation2 + $0x180] sm:$0xff]
    %v90 = vld [vmem:[#allocation2 + $0x188] sm:$0xff]
    %v91 = vld [vmem:[#allocation2 + $0x190] sm:$0xff]
    %v92 = vld [vmem:[#allocation2 + $0x198] sm:$0xff]
    %v93 = vld [vmem:[#allocation2 + $0x1a0] sm:$0xff]
    %v94 = vld [vmem:[#allocation2 + $0x1a8] sm:$0xff]
    %v95 = vld [vmem:[#allocation2 + $0x1b0] sm:$0xff]
    %v96 = vld [vmem:[#allocation2 + $0x1b8] sm:$0xff]
    %v97 = vld [vmem:[#allocation2 + $0x1c0] sm:$0xff]
    %v98 = vld [vmem:[#allocation2 + $0x1c8] sm:$0xff]
    %v99 = vld [vmem:[#allocation2 + $0x1d0] sm:$0xff]
    %v100 = vld [vmem:[#allocation2 + $0x1d8] sm:$0xff]
    %v101 = vld [vmem:[#allocation2 + $0x1e0] sm:$0xff]
    %v102 = vld [vmem:[#allocation2 + $0x1e8] sm:$0xff]
    %v103 = vld [vmem:[#allocation2 + $0x1f0] sm:$0xff]
    %v104 = vld [vmem:[#allocation2 + $0x1f8] sm:$0xff]
    %v105 = vld [vmem:[#allocation2 + $0x200] sm:$0xff]
    %v106 = vld [vmem:[#allocation2 + $0x208] sm:$0xff]
    %v107 = vld [vmem:[#allocation2 + $0x210] sm:$0xff]
    %v108 = vld [vmem:[#allocation2 + $0x218] sm:$0xff]
    %v109 = vld [vmem:[#allocation2 + $0x220] sm:$0xff]
    %v110 = vld [vmem:[#allocation2 + $0x228] sm:$0xff]
    %v111 = vld [vmem:[#allocation2 + $0x230] sm:$0xff]
    %v112 = vld [vmem:[#allocation2 + $0x238] sm:$0xff]
    %v113 = vld [vmem:[#allocation2 + $0x240] sm:$0xff]
    %v114 = vld [vmem:[#allocation2 + $0x248] sm:$0xff]
    %v115 = vld [vmem:[#allocation2 + $0x250] sm:$0xff]
    %v116 = vld [vmem:[#allocation2 + $0x258] sm:$0xff]
    %v117 = vld [vmem:[#allocation2 + $0x260] sm:$0xff]
    %v118 = vld [vmem:[#allocation2 + $0x268] sm:$0xff]
    %v119 = vld [vmem:[#allocation2 + $0x270] sm:$0xff]
    %v120 = vld [vmem:[#allocation2 + $0x278] sm:$0xff]
    %v121 = vld [vmem:[#allocation2 + $0x280] sm:$0xff]
    %v122 = vld [vmem:[#allocation2 + $0x288] sm:$0xff]
    %v123 = vld [vmem:[#allocation2 + $0x290] sm:$0xff]
    %v124 = vld [vmem:[#allocation2 + $0x298] sm:$0xff]
    %v125 = vld [vmem:[#allocation2 + $0x2a0] sm:$0xff]
    %v126 = vld [vmem:[#allocation2 + $0x2a8] sm:$0xff]
    %v127 = vld [vmem:[#allocation2 + $0x2b0] sm:$0xff]
    %v128 = vld [vmem:[#allocation2 + $0x2b8] sm:$0xff]
    %v129 = vld [vmem:[#allocation2 + $0x2c0] sm:$0xff]
    %v130 = vld [vmem:[#allocation2 + $0x2c8] sm:$0xff]
    %v131 = vld [vmem:[#allocation2 + $0x2d0] sm:$0xff]
    %v132 = vld [vmem:[#allocation2 + $0x2d8] sm:$0xff]
    %v133 = vld [vmem:[#allocation2 + $0x2e0] sm:$0xff]
    %v134 = vld [vmem:[#allocation2 + $0x2e8] sm:$0xff]
    %v135 = vld [vmem:[#allocation2 + $0x2f0] sm:$0xff]
    %v136 = vld [vmem:[#allocation2 + $0x2f8] sm:$0xff]
    %v137 = vld [vmem:[#allocation2 + $0x300] sm:$0xff]
    %v138 = vld [vmem:[#allocation2 + $0x308] sm:$0xff]
    %v139 = vld [vmem:[#allocation2 + $0x310] sm:$0xff]
    %v140 = vld [vmem:[#allocation2 + $0x318] sm:$0xff]
    %v141 = vld [vmem:[#allocation2 + $0x320] sm:$0xff]
    %v142 = vld [vmem:[#allocation2 + $0x328] sm:$0xff]
    %v143 = vld [vmem:[#allocation2 + $0x330] sm:$0xff]
    %v144 = vld [vmem:[#allocation2 + $0x338] sm:$0xff]
    %v145 = vld [vmem:[#allocation2 + $0x340] sm:$0xff]
    %v146 = vld [vmem:[#allocation2 + $0x348] sm:$0xff]
    %v147 = vld [vmem:[#allocation2 + $0x350] sm:$0xff]
    %v148 = vld [vmem:[#allocation2 + $0x358] sm:$0xff]
    %v149 = vld [vmem:[#allocation2 + $0x360] sm:$0xff]
    %v150 = vld [vmem:[#allocation2 + $0x368] sm:$0xff]
    %v151 = vld [vmem:[#allocation2 + $0x370] sm:$0xff]
    %v152 = vld [vmem:[#allocation2 + $0x378] sm:$0xff]
    %v153 = vld [vmem:[#allocation2 + $0x380] sm:$0xff]
    %v154 = vld [vmem:[#allocation2 + $0x388] sm:$0xff]
    %v155 = vld [vmem:[#allocation2 + $0x390] sm:$0xff]
    %v156 = vld [vmem:[#allocation2 + $0x398] sm:$0xff]
    %v157 = vld [vmem:[#allocation2 + $0x3a0] sm:$0xff]
    %v158 = vld [vmem:[#allocation2 + $0x3a8] sm:$0xff]
    %v159 = vld [vmem:[#allocation2 + $0x3b0] sm:$0xff]
    %v160 = vld [vmem:[#allocation2 + $0x3b8] sm:$0xff]
    %v161 = vld [vmem:[#allocation2 + $0x3c0] sm:$0xff]
    %v162 = vld [vmem:[#allocation2 + $0x3c8] sm:$0xff]
    %v163 = vld [vmem:[#allocation2 + $0x3d0] sm:$0xff]
    %v164 = vld [vmem:[#allocation2 + $0x3d8] sm:$0xff]
    %v165 = vld [vmem:[#allocation2 + $0x3e0] sm:$0xff]
    %v166 = vld [vmem:[#allocation2 + $0x3e8] sm:$0xff]
    %v167 = vld [vmem:[#allocation2 + $0x3f0] sm:$0xff]
    %v168 = vld [vmem:[#allocation2 + $0x3f8] sm:$0xff]
    %v169 = vld [vmem:[#allocation2 + $0x400] sm:$0xff]
    %v170 = vld [vmem:[#allocation2 + $0x408] sm:$0xff]
    %v171 = vld [vmem:[#allocation2 + $0x410] sm:$0xff]
    %v172 = vld [vmem:[#allocation2 + $0x418] sm:$0xff]
    %v173 = vld [vmem:[#allocation2 + $0x420] sm:$0xff]
    %v174 = vld [vmem:[#allocation2 + $0x428] sm:$0xff]
    %v175 = vld [vmem:[#allocation2 + $0x430] sm:$0xff]
    %v176 = vld [vmem:[#allocation2 + $0x438] sm:$0xff]
    %v177 = vld [vmem:[#allocation2 + $0x440] sm:$0xff]
    %v178 = vld [vmem:[#allocation2 + $0x448] sm:$0xff]
    %v179 = vld [vmem:[#allocation2 + $0x450] sm:$0xff]
    %v180 = vld [vmem:[#allocation2 + $0x458] sm:$0xff]
    %v181 = vld [vmem:[#allocation2 + $0x460] sm:$0xff]
    %v182 = vld [vmem:[#allocation2 + $0x468] sm:$0xff]
    %v183 = vld [vmem:[#allocation2 + $0x470] sm:$0xff]
    %v184 = vld [vmem:[#allocation2 + $0x478] sm:$0xff]
    %v185 = vld [vmem:[#allocation2 + $0x480] sm:$0x33]
    %v186 = vld [vmem:[#allocation2 + $0x488] sm:$0x33]
    %v187 = vld [vmem:[#allocation2 + $0x490] sm:$0x33]
    %v188 = vld [vmem:[#allocation2 + $0x498] sm:$0x33]
    %v189 = vld [vmem:[#allocation2 + $0x4a0] sm:$0x33]
    %v190 = vld [vmem:[#allocation2 + $0x4a8] sm:$0x33]
    %v191 = vld [vmem:[#allocation2 + $0x4b0] sm:$0x33]
    %v192 = vld [vmem:[#allocation2 + $0x4b8] sm:$0x33]
    %v201 = vunpack.c.l.b16 %v33
    %v202 = vunpack.c.h.b16 %v33
    %v203 = vunpack.c.l.b16 %v34
    %v204 = vunpack.c.h.b16 %v34
    %v205 = vunpack.c.l.b16 %v35
    %v206 = vunpack.c.h.b16 %v35
    %v207 = vunpack.c.l.b16 %v36
    %v208 = vunpack.c.h.b16 %v36
    %v209 = vunpack.c.l.b16 %v37
    %v210 = vunpack.c.h.b16 %v37
    %v211 = vunpack.c.l.b16 %v38
    %v212 = vunpack.c.h.b16 %v38
    %v213 = vunpack.c.l.b16 %v39
    %v214 = vunpack.c.h.b16 %v39
    %v215 = vunpack.c.l.b16 %v40
    %v216 = vunpack.c.h.b16 %v40
    %v217 = vpack.c.b16 %v203, %v201
    %v218 = vpack.c.b16 %v204, %v202
    %v219 = vpack.c.b16 %v207, %v205
    %v220 = vpack.c.b16 %v208, %v206
    %v221 = vpack.c.b16 %v211, %v209
    %v222 = vpack.c.b16 %v212, %v210
    %v223 = vpack.c.b16 %v215, %v213
    %v224 = vpack.c.b16 %v216, %v214
    %v381 = vunpack.c.l.b16 %v41
    %v382 = vunpack.c.h.b16 %v41
    %v383 = vunpack.c.l.b16 %v42
    %v384 = vunpack.c.h.b16 %v42
    %v385 = vunpack.c.l.b16 %v43
    %v386 = vunpack.c.h.b16 %v43
    %v387 = vunpack.c.l.b16 %v44
    %v388 = vunpack.c.h.b16 %v44
    %v389 = vunpack.c.l.b16 %v45
    %v390 = vunpack.c.h.b16 %v45
    %v391 = vunpack.c.l.b16 %v46
    %v392 = vunpack.c.h.b16 %v46
    %v393 = vunpack.c.l.b16 %v47
    %v394 = vunpack.c.h.b16 %v47
    %v395 = vunpack.c.l.b16 %v48
    %v396 = vunpack.c.h.b16 %v48
    %v397 = vunpack.c.l.b16 %v49
    %v398 = vunpack.c.h.b16 %v49
    %v399 = vunpack.c.l.b16 %v50
    %v400 = vunpack.c.h.b16 %v50
    %v401 = vunpack.c.l.b16 %v51
    %v402 = vunpack.c.h.b16 %v51
    %v403 = vunpack.c.l.b16 %v52
    %v404 = vunpack.c.h.b16 %v52
    %v405 = vunpack.c.l.b16 %v53
    %v406 = vunpack.c.h.b16 %v53
    %v407 = vunpack.c.l.b16 %v54
    %v408 = vunpack.c.h.b16 %v54
    %v409 = vunpack.c.l.b16 %v55
    %v410 = vunpack.c.h.b16 %v55
    %v411 = vunpack.c.l.b16 %v56
    %v412 = vunpack.c.h.b16 %v56
    %v413 = vunpack.c.l.b16 %v57
    %v414 = vunpack.c.h.b16 %v57
    %v415 = vunpack.c.l.b16 %v58
    %v416 = vunpack.c.h.b16 %v58
    %v417 = vunpack.c.l.b16 %v59
    %v418 = vunpack.c.h.b16 %v59
    %v419 = vunpack.c.l.b16 %v60
    %v420 = vunpack.c.h.b16 %v60
    %v421 = vunpack.c.l.b16 %v61
    %v422 = vunpack.c.h.b16 %v61
    %v423 = vunpack.c.l.b16 %v62
    %v424 = vunpack.c.h.b16 %v62
    %v425 = vunpack.c.l.b16 %v63
    %v426 = vunpack.c.h.b16 %v63
    %v427 = vunpack.c.l.b16 %v64
    %v428 = vunpack.c.h.b16 %v64
    %v429 = vunpack.c.l.b16 %v65
    %v430 = vunpack.c.h.b16 %v65
    %v431 = vunpack.c.l.b16 %v66
    %v432 = vunpack.c.h.b16 %v66
    %v433 = vunpack.c.l.b16 %v67
    %v434 = vunpack.c.h.b16 %v67
    %v435 = vunpack.c.l.b16 %v68
    %v436 = vunpack.c.h.b16 %v68
    %v437 = vunpack.c.l.b16 %v69
    %v438 = vunpack.c.h.b16 %v69
    %v439 = vunpack.c.l.b16 %v70
    %v440 = vunpack.c.h.b16 %v70
    %v441 = vunpack.c.l.b16 %v71
    %v442 = vunpack.c.h.b16 %v71
    %v443 = vunpack.c.l.b16 %v72
    %v444 = vunpack.c.h.b16 %v72
    %v445 = vunpack.c.l.b16 %v73
    %v446 = vunpack.c.h.b16 %v73
    %v447 = vunpack.c.l.b16 %v74
    %v448 = vunpack.c.h.b16 %v74
    %v449 = vunpack.c.l.b16 %v75
    %v450 = vunpack.c.h.b16 %v75
    %v451 = vunpack.c.l.b16 %v76
    %v452 = vunpack.c.h.b16 %v76
    %v453 = vunpack.c.l.b16 %v77
    %v454 = vunpack.c.h.b16 %v77
    %v455 = vunpack.c.l.b16 %v78
    %v456 = vunpack.c.h.b16 %v78
    %v457 = vunpack.c.l.b16 %v79
    %v458 = vunpack.c.h.b16 %v79
    %v459 = vunpack.c.l.b16 %v80
    %v460 = vunpack.c.h.b16 %v80
    %v461 = vunpack.c.l.b16 %v81
    %v462 = vunpack.c.h.b16 %v81
    %v463 = vunpack.c.l.b16 %v82
    %v464 = vunpack.c.h.b16 %v82
    %v465 = vunpack.c.l.b16 %v83
    %v466 = vunpack.c.h.b16 %v83
    %v467 = vunpack.c.l.b16 %v84
    %v468 = vunpack.c.h.b16 %v84
    %v469 = vunpack.c.l.b16 %v85
    %v470 = vunpack.c.h.b16 %v85
    %v471 = vunpack.c.l.b16 %v86
    %v472 = vunpack.c.h.b16 %v86
    %v473 = vunpack.c.l.b16 %v87
    %v474 = vunpack.c.h.b16 %v87
    %v475 = vunpack.c.l.b16 %v88
    %v476 = vunpack.c.h.b16 %v88
    %v477 = vunpack.c.l.b16 %v89
    %v478 = vunpack.c.h.b16 %v89
    %v479 = vunpack.c.l.b16 %v90
    %v480 = vunpack.c.h.b16 %v90
    %v481 = vunpack.c.l.b16 %v91
    %v482 = vunpack.c.h.b16 %v91
    %v483 = vunpack.c.l.b16 %v92
    %v484 = vunpack.c.h.b16 %v92
    %v485 = vunpack.c.l.b16 %v93
    %v486 = vunpack.c.h.b16 %v93
    %v487 = vunpack.c.l.b16 %v94
    %v488 = vunpack.c.h.b16 %v94
    %v489 = vunpack.c.l.b16 %v95
    %v490 = vunpack.c.h.b16 %v95
    %v491 = vunpack.c.l.b16 %v96
    %v492 = vunpack.c.h.b16 %v96
    %v493 = vunpack.c.l.b16 %v97
    %v494 = vunpack.c.h.b16 %v97
    %v495 = vunpack.c.l.b16 %v98
    %v496 = vunpack.c.h.b16 %v98
    %v497 = vunpack.c.l.b16 %v99
    %v498 = vunpack.c.h.b16 %v99
    %v499 = vunpack.c.l.b16 %v100
    %v500 = vunpack.c.h.b16 %v100
    %v501 = vunpack.c.l.b16 %v101
    %v502 = vunpack.c.h.b16 %v101
    %v503 = vunpack.c.l.b16 %v102
    %v504 = vunpack.c.h.b16 %v102
    %v505 = vunpack.c.l.b16 %v103
    %v506 = vunpack.c.h.b16 %v103
    %v507 = vunpack.c.l.b16 %v104
    %v508 = vunpack.c.h.b16 %v104
    %v509 = vunpack.c.l.b16 %v105
    %v510 = vunpack.c.h.b16 %v105
    %v511 = vunpack.c.l.b16 %v106
    %v512 = vunpack.c.h.b16 %v106
    %v513 = vunpack.c.l.b16 %v107
    %v514 = vunpack.c.h.b16 %v107
    %v515 = vunpack.c.l.b16 %v108
    %v516 = vunpack.c.h.b16 %v108
    %v517 = vunpack.c.l.b16 %v109
    %v518 = vunpack.c.h.b16 %v109
    %v519 = vunpack.c.l.b16 %v110
    %v520 = vunpack.c.h.b16 %v110
    %v521 = vunpack.c.l.b16 %v111
    %v522 = vunpack.c.h.b16 %v111
    %v523 = vunpack.c.l.b16 %v112
    %v524 = vunpack.c.h.b16 %v112
    %v525 = vunpack.c.l.b16 %v113
    %v526 = vunpack.c.h.b16 %v113
    %v527 = vunpack.c.l.b16 %v114
    %v528 = vunpack.c.h.b16 %v114
    %v529 = vunpack.c.l.b16 %v115
    %v530 = vunpack.c.h.b16 %v115
    %v531 = vunpack.c.l.b16 %v116
    %v532 = vunpack.c.h.b16 %v116
    %v533 = vunpack.c.l.b16 %v117
    %v534 = vunpack.c.h.b16 %v117
    %v535 = vunpack.c.l.b16 %v118
    %v536 = vunpack.c.h.b16 %v118
    %v537 = vunpack.c.l.b16 %v119
    %v538 = vunpack.c.h.b16 %v119
    %v539 = vunpack.c.l.b16 %v120
    %v540 = vunpack.c.h.b16 %v120
    %v541 = vunpack.c.l.b16 %v121
    %v542 = vunpack.c.h.b16 %v121
    %v543 = vunpack.c.l.b16 %v122
    %v544 = vunpack.c.h.b16 %v122
    %v545 = vunpack.c.l.b16 %v123
    %v546 = vunpack.c.h.b16 %v123
    %v547 = vunpack.c.l.b16 %v124
    %v548 = vunpack.c.h.b16 %v124
    %v549 = vunpack.c.l.b16 %v125
    %v550 = vunpack.c.h.b16 %v125
    %v551 = vunpack.c.l.b16 %v126
    %v552 = vunpack.c.h.b16 %v126
    %v553 = vunpack.c.l.b16 %v127
    %v554 = vunpack.c.h.b16 %v127
    %v555 = vunpack.c.l.b16 %v128
    %v556 = vunpack.c.h.b16 %v128
    %v557 = vunpack.c.l.b16 %v129
    %v558 = vunpack.c.h.b16 %v129
    %v559 = vunpack.c.l.b16 %v130
    %v560 = vunpack.c.h.b16 %v130
    %v561 = vunpack.c.l.b16 %v131
    %v562 = vunpack.c.h.b16 %v131
    %v563 = vunpack.c.l.b16 %v132
    %v564 = vunpack.c.h.b16 %v132
    %v565 = vunpack.c.l.b16 %v133
    %v566 = vunpack.c.h.b16 %v133
    %v567 = vunpack.c.l.b16 %v134
    %v568 = vunpack.c.h.b16 %v134
    %v569 = vunpack.c.l.b16 %v135
    %v570 = vunpack.c.h.b16 %v135
    %v571 = vunpack.c.l.b16 %v136
    %v572 = vunpack.c.h.b16 %v136
    %v573 = vunpack.c.l.b16 %v137
    %v574 = vunpack.c.h.b16 %v137
    %v575 = vunpack.c.l.b16 %v138
    %v576 = vunpack.c.h.b16 %v138
    %v577 = vunpack.c.l.b16 %v139
    %v578 = vunpack.c.h.b16 %v139
    %v579 = vunpack.c.l.b16 %v140
    %v580 = vunpack.c.h.b16 %v140
    %v581 = vunpack.c.l.b16 %v141
    %v582 = vunpack.c.h.b16 %v141
    %v583 = vunpack.c.l.b16 %v142
    %v584 = vunpack.c.h.b16 %v142
    %v585 = vunpack.c.l.b16 %v143
    %v586 = vunpack.c.h.b16 %v143
    %v587 = vunpack.c.l.b16 %v144
    %v588 = vunpack.c.h.b16 %v144
    %v589 = vunpack.c.l.b16 %v145
    %v590 = vunpack.c.h.b16 %v145
    %v591 = vunpack.c.l.b16 %v146
    %v592 = vunpack.c.h.b16 %v146
    %v593 = vunpack.c.l.b16 %v147
    %v594 = vunpack.c.h.b16 %v147
    %v595 = vunpack.c.l.b16 %v148
    %v596 = vunpack.c.h.b16 %v148
    %v597 = vunpack.c.l.b16 %v149
    %v598 = vunpack.c.h.b16 %v149
    %v599 = vunpack.c.l.b16 %v150
    %v600 = vunpack.c.h.b16 %v150
    %v601 = vunpack.c.l.b16 %v151
    %v602 = vunpack.c.h.b16 %v151
    %v603 = vunpack.c.l.b16 %v152
    %v604 = vunpack.c.h.b16 %v152
    %v605 = vunpack.c.l.b16 %v153
    %v606 = vunpack.c.h.b16 %v153
    %v607 = vunpack.c.l.b16 %v154
    %v608 = vunpack.c.h.b16 %v154
    %v609 = vunpack.c.l.b16 %v155
    %v610 = vunpack.c.h.b16 %v155
    %v611 = vunpack.c.l.b16 %v156
    %v612 = vunpack.c.h.b16 %v156
    %v613 = vunpack.c.l.b16 %v157
    %v614 = vunpack.c.h.b16 %v157
    %v615 = vunpack.c.l.b16 %v158
    %v616 = vunpack.c.h.b16 %v158
    %v617 = vunpack.c.l.b16 %v159
    %v618 = vunpack.c.h.b16 %v159
    %v619 = vunpack.c.l.b16 %v160
    %v620 = vunpack.c.h.b16 %v160
    %v621 = vunpack.c.l.b16 %v161
    %v622 = vunpack.c.h.b16 %v161
    %v623 = vunpack.c.l.b16 %v162
    %v624 = vunpack.c.h.b16 %v162
    %v625 = vunpack.c.l.b16 %v163
    %v626 = vunpack.c.h.b16 %v163
    %v627 = vunpack.c.l.b16 %v164
    %v628 = vunpack.c.h.b16 %v164
    %v629 = vunpack.c.l.b16 %v165
    %v630 = vunpack.c.h.b16 %v165
    %v631 = vunpack.c.l.b16 %v166
    %v632 = vunpack.c.h.b16 %v166
    %v633 = vunpack.c.l.b16 %v167
    %v634 = vunpack.c.h.b16 %v167
    %v635 = vunpack.c.l.b16 %v168
    %v636 = vunpack.c.h.b16 %v168
    %v637 = vunpack.c.l.b16 %v169
    %v638 = vunpack.c.h.b16 %v169
    %v639 = vunpack.c.l.b16 %v170
    %v640 = vunpack.c.h.b16 %v170
    %v641 = vunpack.c.l.b16 %v171
    %v642 = vunpack.c.h.b16 %v171
    %v643 = vunpack.c.l.b16 %v172
    %v644 = vunpack.c.h.b16 %v172
    %v645 = vunpack.c.l.b16 %v173
    %v646 = vunpack.c.h.b16 %v173
    %v647 = vunpack.c.l.b16 %v174
    %v648 = vunpack.c.h.b16 %v174
    %v649 = vunpack.c.l.b16 %v175
    %v650 = vunpack.c.h.b16 %v175
    %v651 = vunpack.c.l.b16 %v176
    %v652 = vunpack.c.h.b16 %v176
    %v653 = vunpack.c.l.b16 %v177
    %v654 = vunpack.c.h.b16 %v177
    %v655 = vunpack.c.l.b16 %v178
    %v656 = vunpack.c.h.b16 %v178
    %v657 = vunpack.c.l.b16 %v179
    %v658 = vunpack.c.h.b16 %v179
    %v659 = vunpack.c.l.b16 %v180
    %v660 = vunpack.c.h.b16 %v180
    %v661 = vunpack.c.l.b16 %v181
    %v662 = vunpack.c.h.b16 %v181
    %v663 = vunpack.c.l.b16 %v182
    %v664 = vunpack.c.h.b16 %v182
    %v665 = vunpack.c.l.b16 %v183
    %v666 = vunpack.c.h.b16 %v183
    %v667 = vunpack.c.l.b16 %v184
    %v668 = vunpack.c.h.b16 %v184
    %v669 = vunpack.c.l.b16 %v185
    %v670 = vunpack.c.h.b16 %v185
    %v671 = vunpack.c.l.b16 %v186
    %v672 = vunpack.c.h.b16 %v186
    %v673 = vunpack.c.l.b16 %v187
    %v674 = vunpack.c.h.b16 %v187
    %v675 = vunpack.c.l.b16 %v188
    %v676 = vunpack.c.h.b16 %v188
    %v677 = vunpack.c.l.b16 %v189
    %v678 = vunpack.c.h.b16 %v189
    %v679 = vunpack.c.l.b16 %v190
    %v680 = vunpack.c.h.b16 %v190
    %v681 = vunpack.c.l.b16 %v191
    %v682 = vunpack.c.h.b16 %v191
    %v683 = vunpack.c.l.b16 %v192
    %v684 = vunpack.c.h.b16 %v192
    %v685 = vpack.c.b16 %v397, %v381
    %v686 = vpack.c.b16 %v398, %v382
    %v687 = vpack.c.b16 %v399, %v383
    %v688 = vpack.c.b16 %v400, %v384
    %v689 = vpack.c.b16 %v401, %v385
    %v690 = vpack.c.b16 %v402, %v386
    %v691 = vpack.c.b16 %v403, %v387
    %v692 = vpack.c.b16 %v404, %v388
    %v693 = vpack.c.b16 %v405, %v389
    %v694 = vpack.c.b16 %v406, %v390
    %v695 = vpack.c.b16 %v407, %v391
    %v696 = vpack.c.b16 %v408, %v392
    %v697 = vpack.c.b16 %v409, %v393
    %v698 = vpack.c.b16 %v410, %v394
    %v699 = vpack.c.b16 %v411, %v395
    %v700 = vpack.c.b16 %v412, %v396
    %v701 = vpack.c.b16 %v429, %v413
    %v702 = vpack.c.b16 %v430, %v414
    %v703 = vpack.c.b16 %v431, %v415
    %v704 = vpack.c.b16 %v432, %v416
    %v705 = vpack.c.b16 %v433, %v417
    %v706 = vpack.c.b16 %v434, %v418
    %v707 = vpack.c.b16 %v435, %v419
    %v708 = vpack.c.b16 %v436, %v420
    %v709 = vpack.c.b16 %v437, %v421
    %v710 = vpack.c.b16 %v438, %v422
    %v711 = vpack.c.b16 %v439, %v423
    %v712 = vpack.c.b16 %v440, %v424
    %v713 = vpack.c.b16 %v441, %v425
    %v714 = vpack.c.b16 %v442, %v426
    %v715 = vpack.c.b16 %v443, %v427
    %v716 = vpack.c.b16 %v444, %v428
    %v717 = vpack.c.b16 %v461, %v445
    %v718 = vpack.c.b16 %v462, %v446
    %v719 = vpack.c.b16 %v463, %v447
    %v720 = vpack.c.b16 %v464, %v448
    %v721 = vpack.c.b16 %v465, %v449
    %v722 = vpack.c.b16 %v466, %v450
    %v723 = vpack.c.b16 %v467, %v451
    %v724 = vpack.c.b16 %v468, %v452
    %v725 = vpack.c.b16 %v469, %v453
    %v726 = vpack.c.b16 %v470, %v454
    %v727 = vpack.c.b16 %v471, %v455
    %v728 = vpack.c.b16 %v472, %v456
    %v729 = vpack.c.b16 %v473, %v457
    %v730 = vpack.c.b16 %v474, %v458
    %v731 = vpack.c.b16 %v475, %v459
    %v732 = vpack.c.b16 %v476, %v460
    %v733 = vpack.c.b16 %v493, %v477
    %v734 = vpack.c.b16 %v494, %v478
    %v735 = vpack.c.b16 %v495, %v479
    %v736 = vpack.c.b16 %v496, %v480
    %v737 = vpack.c.b16 %v497, %v481
    %v738 = vpack.c.b16 %v498, %v482
    %v739 = vpack.c.b16 %v499, %v483
    %v740 = vpack.c.b16 %v500, %v484
    %v741 = vpack.c.b16 %v501, %v485
    %v742 = vpack.c.b16 %v502, %v486
    %v743 = vpack.c.b16 %v503, %v487
    %v744 = vpack.c.b16 %v504, %v488
    %v745 = vpack.c.b16 %v505, %v489
    %v746 = vpack.c.b16 %v506, %v490
    %v747 = vpack.c.b16 %v507, %v491
    %v748 = vpack.c.b16 %v508, %v492
    %v749 = vpack.c.b16 %v525, %v509
    %v750 = vpack.c.b16 %v526, %v510
    %v751 = vpack.c.b16 %v527, %v511
    %v752 = vpack.c.b16 %v528, %v512
    %v753 = vpack.c.b16 %v529, %v513
    %v754 = vpack.c.b16 %v530, %v514
    %v755 = vpack.c.b16 %v531, %v515
    %v756 = vpack.c.b16 %v532, %v516
    %v757 = vpack.c.b16 %v533, %v517
    %v758 = vpack.c.b16 %v534, %v518
    %v759 = vpack.c.b16 %v535, %v519
    %v760 = vpack.c.b16 %v536, %v520
    %v761 = vpack.c.b16 %v537, %v521
    %v762 = vpack.c.b16 %v538, %v522
    %v763 = vpack.c.b16 %v539, %v523
    %v764 = vpack.c.b16 %v540, %v524
    %v765 = vpack.c.b16 %v557, %v541
    %v766 = vpack.c.b16 %v558, %v542
    %v767 = vpack.c.b16 %v559, %v543
    %v768 = vpack.c.b16 %v560, %v544
    %v769 = vpack.c.b16 %v561, %v545
    %v770 = vpack.c.b16 %v562, %v546
    %v771 = vpack.c.b16 %v563, %v547
    %v772 = vpack.c.b16 %v564, %v548
    %v773 = vpack.c.b16 %v565, %v549
    %v774 = vpack.c.b16 %v566, %v550
    %v775 = vpack.c.b16 %v567, %v551
    %v776 = vpack.c.b16 %v568, %v552
    %v777 = vpack.c.b16 %v569, %v553
    %v778 = vpack.c.b16 %v570, %v554
    %v779 = vpack.c.b16 %v571, %v555
    %v780 = vpack.c.b16 %v572, %v556
    %v781 = vpack.c.b16 %v589, %v573
    %v782 = vpack.c.b16 %v590, %v574
    %v783 = vpack.c.b16 %v591, %v575
    %v784 = vpack.c.b16 %v592, %v576
    %v785 = vpack.c.b16 %v593, %v577
    %v786 = vpack.c.b16 %v594, %v578
    %v787 = vpack.c.b16 %v595, %v579
    %v788 = vpack.c.b16 %v596, %v580
    %v789 = vpack.c.b16 %v597, %v581
    %v790 = vpack.c.b16 %v598, %v582
    %v791 = vpack.c.b16 %v599, %v583
    %v792 = vpack.c.b16 %v600, %v584
    %v793 = vpack.c.b16 %v601, %v585
    %v794 = vpack.c.b16 %v602, %v586
    %v795 = vpack.c.b16 %v603, %v587
    %v796 = vpack.c.b16 %v604, %v588
    %v797 = vpack.c.b16 %v621, %v605
    %v798 = vpack.c.b16 %v622, %v606
    %v799 = vpack.c.b16 %v623, %v607
    %v800 = vpack.c.b16 %v624, %v608
    %v801 = vpack.c.b16 %v625, %v609
    %v802 = vpack.c.b16 %v626, %v610
    %v803 = vpack.c.b16 %v627, %v611
    %v804 = vpack.c.b16 %v628, %v612
    %v805 = vpack.c.b16 %v629, %v613
    %v806 = vpack.c.b16 %v630, %v614
    %v807 = vpack.c.b16 %v631, %v615
    %v808 = vpack.c.b16 %v632, %v616
    %v809 = vpack.c.b16 %v633, %v617
    %v810 = vpack.c.b16 %v634, %v618
    %v811 = vpack.c.b16 %v635, %v619
    %v812 = vpack.c.b16 %v636, %v620
    %v813 = vpack.c.b16 %v653, %v637
    %v814 = vpack.c.b16 %v654, %v638
    %v815 = vpack.c.b16 %v655, %v639
    %v816 = vpack.c.b16 %v656, %v640
    %v817 = vpack.c.b16 %v657, %v641
    %v818 = vpack.c.b16 %v658, %v642
    %v819 = vpack.c.b16 %v659, %v643
    %v820 = vpack.c.b16 %v660, %v644
    %v821 = vpack.c.b16 %v661, %v645
    %v822 = vpack.c.b16 %v662, %v646
    %v823 = vpack.c.b16 %v663, %v647
    %v824 = vpack.c.b16 %v664, %v648
    %v825 = vpack.c.b16 %v665, %v649
    %v826 = vpack.c.b16 %v666, %v650
    %v827 = vpack.c.b16 %v667, %v651
    %v828 = vpack.c.b16 %v668, %v652
    %v829 = vpack.c.b16 %v669, %v669
    %v830 = vpack.c.b16 %v670, %v670
    %v831 = vpack.c.b16 %v671, %v671
    %v832 = vpack.c.b16 %v672, %v672
    %v833 = vpack.c.b16 %v673, %v673
    %v834 = vpack.c.b16 %v674, %v674
    %v835 = vpack.c.b16 %v675, %v675
    %v836 = vpack.c.b16 %v676, %v676
    %v837 = vpack.c.b16 %v677, %v677
    %v838 = vpack.c.b16 %v678, %v678
    %v839 = vpack.c.b16 %v679, %v679
    %v840 = vpack.c.b16 %v680, %v680
    %v841 = vpack.c.b16 %v681, %v681
    %v842 = vpack.c.b16 %v682, %v682
    %v843 = vpack.c.b16 %v683, %v683
    %v844 = vpack.c.b16 %v684, %v684
    %vm989 = vcmask 154624
    %v991 = vsel %vm989, %v218, 0
    %v994 = vsel %vm989, %v220, 0
    %v997 = vsel %vm989, %v222, 0
    %v1000 = vsel %vm989, %v224, 0
    %vm1002 = vcmask 1040384
    %vm1003 = vcmask 1041408
    %v1004 = vsel %vm1002, 4294967295, 65535
    %v1005 = vsel %vm1003, %v1004, 0
    %v1007 = vand.u32 %v829, %v1005
    %v1010 = vand.u32 %v830, %v1005
    %v1013 = vand.u32 %v831, %v1005
    %v1016 = vand.u32 %v832, %v1005
    %v1019 = vand.u32 %v833, %v1005
    %v1022 = vand.u32 %v834, %v1005
    %v1025 = vand.u32 %v835, %v1005
    %v1028 = vand.u32 %v836, %v1005
    %v1031 = vand.u32 %v837, %v1005
    %v1034 = vand.u32 %v838, %v1005
    %v1037 = vand.u32 %v839, %v1005
    %v1040 = vand.u32 %v840, %v1005
    %v1043 = vand.u32 %v841, %v1005
    %v1046 = vand.u32 %v842, %v1005
    %v1049 = vand.u32 %v843, %v1005
    %v1052 = vand.u32 %v844, %v1005
    %1054 = vmatprep.subr.bf16.mxu0 %v798
    %1055 = vmatpush1.bf16.msra.mxu0 %v797
    %1056 = vmatprep.subr.bf16.mxu0 %v782
    %1057 = vmatpush1.bf16.msra.mxu0 %v781
    %1058 = vmatprep.subr.bf16.mxu0 %v766
    %1059 = vmatpush1.bf16.msra.mxu0 %v765
    %1060 = vmatprep.subr.bf16.mxu0 %v750
    %1061 = vmatpush1.bf16.msra.mxu0 %v749
    %1062 = vmatprep.subr.bf16.mxu0 %v734
    %1063 = vmatpush1.bf16.msra.mxu0 %v733
    %1064 = vmatprep.subr.bf16.mxu0 %v718
    %1065 = vmatpush1.bf16.msra.mxu0 %v717
    %1066 = vmatprep.subr.bf16.mxu0 %v702
    %1067 = vmatpush1.bf16.msra.mxu0 %v701
    %1068 = vmatprep.subr.bf16.mxu0 %v686
    %1069 = vmatpush1.bf16.msra.mxu0 %v685
    %1070 = vmatprep.subr.bf16.mxu0 0
    %1071 = vmatpush2.bf16.msra.mxu0 0
    %1072 = vmatprep.subr.bf16.mxu0 0
    %1073 = vmatpush2.bf16.msra.mxu0 0
    %1074 = vmatprep.subr.bf16.mxu0 0
    %1075 = vmatpush2.bf16.msra.mxu0 0
    %1076 = vmatprep.subr.bf16.mxu0 0
    %1077 = vmatpush2.bf16.msra.mxu0 0
    %1078 = vmatprep.subr.bf16.mxu0 0
    %1079 = vmatpush2.bf16.msra.mxu0 0
    %1080 = vmatprep.subr.bf16.mxu0 0
    %1081 = vmatpush2.bf16.msra.mxu0 0
    %1082 = vmatprep.subr.bf16.mxu0 %v1010
    %1083 = vmatpush2.bf16.msra.mxu0 %v1007
    %1084 = vmatprep.subr.bf16.mxu0 %v814
    %1085 = vmatpush2.bf16.msra.mxu0 %v813
    %1086 = vmatprep.mubr.bf16.mxu0 %v991
    %1087 = vmatmul.mubr.bf16.gmra.mxu0 %v217
    %v1088 = vpop.f32.mrf.mxu0
    %v1089 = vadd.f32 0.0, %v1088
    %v1090 = vpop.f32.mrf.mxu0
    %v1091 = vadd.f32 0.0, %v1090
    %v1092 = vpop.f32.mrf.mxu0
    %v1093 = vadd.f32 0.0, %v1092
    %v1094 = vpop.f32.mrf.mxu0
    %v1095 = vadd.f32 0.0, %v1094
    %1096 = vmatprep.mubr.bf16.mxu0 %v994
    %1097 = vmatmul.mubr.bf16.gmra.mxu0 %v219
    %v1098 = vpop.f32.mrf.mxu0
    %v1099 = vadd.f32 0.0, %v1098
    %v1100 = vpop.f32.mrf.mxu0
    %v1101 = vadd.f32 0.0, %v1100
    %v1102 = vpop.f32.mrf.mxu0
    %v1103 = vadd.f32 0.0, %v1102
    %v1104 = vpop.f32.mrf.mxu0
    %v1105 = vadd.f32 0.0, %v1104
    %1106 = vmatprep.mubr.bf16.mxu0 %v997
    %1107 = vmatmul.mubr.bf16.gmra.mxu0 %v221
    %v1108 = vpop.f32.mrf.mxu0
    %v1109 = vadd.f32 0.0, %v1108
    %v1110 = vpop.f32.mrf.mxu0
    %v1111 = vadd.f32 0.0, %v1110
    %v1112 = vpop.f32.mrf.mxu0
    %v1113 = vadd.f32 0.0, %v1112
    %v1114 = vpop.f32.mrf.mxu0
    %v1115 = vadd.f32 0.0, %v1114
    %1116 = vmatprep.mubr.bf16.mxu0 %v1000
    %1117 = vmatmul.mubr.bf16.gmra.mxu0 %v223
    %v1118 = vpop.f32.mrf.mxu0
    %v1119 = vadd.f32 0.0, %v1118
    %v1120 = vpop.f32.mrf.mxu0
    %v1121 = vadd.f32 0.0, %v1120
    %v1122 = vpop.f32.mrf.mxu0
    %v1123 = vadd.f32 0.0, %v1122
    %v1124 = vpop.f32.mrf.mxu0
    %v1125 = vadd.f32 0.0, %v1124
    %1126 = vdwg.mxu0
    %1127 = vmatprep.subr.bf16.mxu0 %v800
    %1128 = vmatpush1.bf16.msra.mxu0 %v799
    %1129 = vmatprep.subr.bf16.mxu0 %v784
    %1130 = vmatpush1.bf16.msra.mxu0 %v783
    %1131 = vmatprep.subr.bf16.mxu0 %v768
    %1132 = vmatpush1.bf16.msra.mxu0 %v767
    %1133 = vmatprep.subr.bf16.mxu0 %v752
    %1134 = vmatpush1.bf16.msra.mxu0 %v751
    %1135 = vmatprep.subr.bf16.mxu0 %v736
    %1136 = vmatpush1.bf16.msra.mxu0 %v735
    %1137 = vmatprep.subr.bf16.mxu0 %v720
    %1138 = vmatpush1.bf16.msra.mxu0 %v719
    %1139 = vmatprep.subr.bf16.mxu0 %v704
    %1140 = vmatpush1.bf16.msra.mxu0 %v703
    %1141 = vmatprep.subr.bf16.mxu0 %v688
    %1142 = vmatpush1.bf16.msra.mxu0 %v687
    %1143 = vmatprep.subr.bf16.mxu0 0
    %1144 = vmatpush2.bf16.msra.mxu0 0
    %1145 = vmatprep.subr.bf16.mxu0 0
    %1146 = vmatpush2.bf16.msra.mxu0 0
    %1147 = vmatprep.subr.bf16.mxu0 0
    %1148 = vmatpush2.bf16.msra.mxu0 0
    %1149 = vmatprep.subr.bf16.mxu0 0
    %1150 = vmatpush2.bf16.msra.mxu0 0
    %1151 = vmatprep.subr.bf16.mxu0 0
    %1152 = vmatpush2.bf16.msra.mxu0 0
    %1153 = vmatprep.subr.bf16.mxu0 0
    %1154 = vmatpush2.bf16.msra.mxu0 0
    %1155 = vmatprep.subr.bf16.mxu0 %v1016
    %1156 = vmatpush2.bf16.msra.mxu0 %v1013
    %1157 = vmatprep.subr.bf16.mxu0 %v816
    %1158 = vmatpush2.bf16.msra.mxu0 %v815
    %1159 = vmatprep.mubr.bf16.mxu0 %v991
    %1160 = vmatmul.mubr.bf16.gmra.mxu0 %v217
    %v1161 = vpop.f32.mrf.mxu0
    %v1162 = vadd.f32 0.0, %v1161
    %v1163 = vpop.f32.mrf.mxu0
    %v1164 = vadd.f32 0.0, %v1163
    %v1165 = vpop.f32.mrf.mxu0
    %v1166 = vadd.f32 0.0, %v1165
    %v1167 = vpop.f32.mrf.mxu0
    %v1168 = vadd.f32 0.0, %v1167
    %1169 = vmatprep.mubr.bf16.mxu0 %v994
    %1170 = vmatmul.mubr.bf16.gmra.mxu0 %v219
    %v1171 = vpop.f32.mrf.mxu0
    %v1172 = vadd.f32 0.0, %v1171
    %v1173 = vpop.f32.mrf.mxu0
    %v1174 = vadd.f32 0.0, %v1173
    %v1175 = vpop.f32.mrf.mxu0
    %v1176 = vadd.f32 0.0, %v1175
    %v1177 = vpop.f32.mrf.mxu0
    %v1178 = vadd.f32 0.0, %v1177
    %1179 = vmatprep.mubr.bf16.mxu0 %v997
    %1180 = vmatmul.mubr.bf16.gmra.mxu0 %v221
    %v1181 = vpop.f32.mrf.mxu0
    %v1182 = vadd.f32 0.0, %v1181
    %v1183 = vpop.f32.mrf.mxu0
    %v1184 = vadd.f32 0.0, %v1183
    %v1185 = vpop.f32.mrf.mxu0
    %v1186 = vadd.f32 0.0, %v1185
    %v1187 = vpop.f32.mrf.mxu0
    %v1188 = vadd.f32 0.0, %v1187
    %1189 = vmatprep.mubr.bf16.mxu0 %v1000
    %1190 = vmatmul.mubr.bf16.gmra.mxu0 %v223
    %v1191 = vpop.f32.mrf.mxu0
    %v1192 = vadd.f32 0.0, %v1191
    %v1193 = vpop.f32.mrf.mxu0
    %v1194 = vadd.f32 0.0, %v1193
    %v1195 = vpop.f32.mrf.mxu0
    %v1196 = vadd.f32 0.0, %v1195
    %v1197 = vpop.f32.mrf.mxu0
    %v1198 = vadd.f32 0.0, %v1197
    %1199 = vdwg.mxu0
    %1200 = vmatprep.subr.bf16.mxu0 %v802
    %1201 = vmatpush1.bf16.msra.mxu0 %v801
    %1202 = vmatprep.subr.bf16.mxu0 %v786
    %1203 = vmatpush1.bf16.msra.mxu0 %v785
    %1204 = vmatprep.subr.bf16.mxu0 %v770
    %1205 = vmatpush1.bf16.msra.mxu0 %v769
    %1206 = vmatprep.subr.bf16.mxu0 %v754
    %1207 = vmatpush1.bf16.msra.mxu0 %v753
    %1208 = vmatprep.subr.bf16.mxu0 %v738
    %1209 = vmatpush1.bf16.msra.mxu0 %v737
    %1210 = vmatprep.subr.bf16.mxu0 %v722
    %1211 = vmatpush1.bf16.msra.mxu0 %v721
    %1212 = vmatprep.subr.bf16.mxu0 %v706
    %1213 = vmatpush1.bf16.msra.mxu0 %v705
    %1214 = vmatprep.subr.bf16.mxu0 %v690
    %1215 = vmatpush1.bf16.msra.mxu0 %v689
    %1216 = vmatprep.subr.bf16.mxu0 0
    %1217 = vmatpush2.bf16.msra.mxu0 0
    %1218 = vmatprep.subr.bf16.mxu0 0
    %1219 = vmatpush2.bf16.msra.mxu0 0
    %1220 = vmatprep.subr.bf16.mxu0 0
    %1221 = vmatpush2.bf16.msra.mxu0 0
    %1222 = vmatprep.subr.bf16.mxu0 0
    %1223 = vmatpush2.bf16.msra.mxu0 0
    %1224 = vmatprep.subr.bf16.mxu0 0
    %1225 = vmatpush2.bf16.msra.mxu0 0
    %1226 = vmatprep.subr.bf16.mxu0 0
    %1227 = vmatpush2.bf16.msra.mxu0 0
    %1228 = vmatprep.subr.bf16.mxu0 %v1022
    %1229 = vmatpush2.bf16.msra.mxu0 %v1019
    %1230 = vmatprep.subr.bf16.mxu0 %v818
    %1231 = vmatpush2.bf16.msra.mxu0 %v817
    %1232 = vmatprep.mubr.bf16.mxu0 %v991
    %1233 = vmatmul.mubr.bf16.gmra.mxu0 %v217
    %v1234 = vpop.f32.mrf.mxu0
    %v1235 = vadd.f32 0.0, %v1234
    %v1236 = vpop.f32.mrf.mxu0
    %v1237 = vadd.f32 0.0, %v1236
    %v1238 = vpop.f32.mrf.mxu0
    %v1239 = vadd.f32 0.0, %v1238
    %v1240 = vpop.f32.mrf.mxu0
    %v1241 = vadd.f32 0.0, %v1240
    %1242 = vmatprep.mubr.bf16.mxu0 %v994
    %1243 = vmatmul.mubr.bf16.gmra.mxu0 %v219
    %v1244 = vpop.f32.mrf.mxu0
    %v1245 = vadd.f32 0.0, %v1244
    %v1246 = vpop.f32.mrf.mxu0
    %v1247 = vadd.f32 0.0, %v1246
    %v1248 = vpop.f32.mrf.mxu0
    %v1249 = vadd.f32 0.0, %v1248
    %v1250 = vpop.f32.mrf.mxu0
    %v1251 = vadd.f32 0.0, %v1250
    %1252 = vmatprep.mubr.bf16.mxu0 %v997
    %1253 = vmatmul.mubr.bf16.gmra.mxu0 %v221
    %v1254 = vpop.f32.mrf.mxu0
    %v1255 = vadd.f32 0.0, %v1254
    %v1256 = vpop.f32.mrf.mxu0
    %v1257 = vadd.f32 0.0, %v1256
    %v1258 = vpop.f32.mrf.mxu0
    %v1259 = vadd.f32 0.0, %v1258
    %v1260 = vpop.f32.mrf.mxu0
    %v1261 = vadd.f32 0.0, %v1260
    %1262 = vmatprep.mubr.bf16.mxu0 %v1000
    %1263 = vmatmul.mubr.bf16.gmra.mxu0 %v223
    %v1264 = vpop.f32.mrf.mxu0
    %v1265 = vadd.f32 0.0, %v1264
    %v1266 = vpop.f32.mrf.mxu0
    %v1267 = vadd.f32 0.0, %v1266
    %v1268 = vpop.f32.mrf.mxu0
    %v1269 = vadd.f32 0.0, %v1268
    %v1270 = vpop.f32.mrf.mxu0
    %v1271 = vadd.f32 0.0, %v1270
    %1272 = vdwg.mxu0
    %1273 = vmatprep.subr.bf16.mxu0 %v804
    %1274 = vmatpush1.bf16.msra.mxu0 %v803
    %1275 = vmatprep.subr.bf16.mxu0 %v788
    %1276 = vmatpush1.bf16.msra.mxu0 %v787
    %1277 = vmatprep.subr.bf16.mxu0 %v772
    %1278 = vmatpush1.bf16.msra.mxu0 %v771
    %1279 = vmatprep.subr.bf16.mxu0 %v756
    %1280 = vmatpush1.bf16.msra.mxu0 %v755
    %1281 = vmatprep.subr.bf16.mxu0 %v740
    %1282 = vmatpush1.bf16.msra.mxu0 %v739
    %1283 = vmatprep.subr.bf16.mxu0 %v724
    %1284 = vmatpush1.bf16.msra.mxu0 %v723
    %1285 = vmatprep.subr.bf16.mxu0 %v708
    %1286 = vmatpush1.bf16.msra.mxu0 %v707
    %1287 = vmatprep.subr.bf16.mxu0 %v692
    %1288 = vmatpush1.bf16.msra.mxu0 %v691
    %1289 = vmatprep.subr.bf16.mxu0 0
    %1290 = vmatpush2.bf16.msra.mxu0 0
    %1291 = vmatprep.subr.bf16.mxu0 0
    %1292 = vmatpush2.bf16.msra.mxu0 0
    %1293 = vmatprep.subr.bf16.mxu0 0
    %1294 = vmatpush2.bf16.msra.mxu0 0
    %1295 = vmatprep.subr.bf16.mxu0 0
    %1296 = vmatpush2.bf16.msra.mxu0 0
    %1297 = vmatprep.subr.bf16.mxu0 0
    %1298 = vmatpush2.bf16.msra.mxu0 0
    %1299 = vmatprep.subr.bf16.mxu0 0
    %1300 = vmatpush2.bf16.msra.mxu0 0
    %1301 = vmatprep.subr.bf16.mxu0 %v1028
    %1302 = vmatpush2.bf16.msra.mxu0 %v1025
    %1303 = vmatprep.subr.bf16.mxu0 %v820
    %1304 = vmatpush2.bf16.msra.mxu0 %v819
    %1305 = vmatprep.mubr.bf16.mxu0 %v991
    %1306 = vmatmul.mubr.bf16.gmra.mxu0 %v217
    %v1307 = vpop.f32.mrf.mxu0
    %v1308 = vadd.f32 0.0, %v1307
    %v1309 = vpop.f32.mrf.mxu0
    %v1310 = vadd.f32 0.0, %v1309
    %v1311 = vpop.f32.mrf.mxu0
    %v1312 = vadd.f32 0.0, %v1311
    %v1313 = vpop.f32.mrf.mxu0
    %v1314 = vadd.f32 0.0, %v1313
    %1315 = vmatprep.mubr.bf16.mxu0 %v994
    %1316 = vmatmul.mubr.bf16.gmra.mxu0 %v219
    %v1317 = vpop.f32.mrf.mxu0
    %v1318 = vadd.f32 0.0, %v1317
    %v1319 = vpop.f32.mrf.mxu0
    %v1320 = vadd.f32 0.0, %v1319
    %v1321 = vpop.f32.mrf.mxu0
    %v1322 = vadd.f32 0.0, %v1321
    %v1323 = vpop.f32.mrf.mxu0
    %v1324 = vadd.f32 0.0, %v1323
    %1325 = vmatprep.mubr.bf16.mxu0 %v997
    %1326 = vmatmul.mubr.bf16.gmra.mxu0 %v221
    %v1327 = vpop.f32.mrf.mxu0
    %v1328 = vadd.f32 0.0, %v1327
    %v1329 = vpop.f32.mrf.mxu0
    %v1330 = vadd.f32 0.0, %v1329
    %v1331 = vpop.f32.mrf.mxu0
    %v1332 = vadd.f32 0.0, %v1331
    %v1333 = vpop.f32.mrf.mxu0
    %v1334 = vadd.f32 0.0, %v1333
    %1335 = vmatprep.mubr.bf16.mxu0 %v1000
    %1336 = vmatmul.mubr.bf16.gmra.mxu0 %v223
    %v1337 = vpop.f32.mrf.mxu0
    %v1338 = vadd.f32 0.0, %v1337
    %v1339 = vpop.f32.mrf.mxu0
    %v1340 = vadd.f32 0.0, %v1339
    %v1341 = vpop.f32.mrf.mxu0
    %v1342 = vadd.f32 0.0, %v1341
    %v1343 = vpop.f32.mrf.mxu0
    %v1344 = vadd.f32 0.0, %v1343
    %1345 = vdwg.mxu0
    %1346 = vmatprep.subr.bf16.mxu0 %v806
    %1347 = vmatpush1.bf16.msra.mxu0 %v805
    %1348 = vmatprep.subr.bf16.mxu0 %v790
    %1349 = vmatpush1.bf16.msra.mxu0 %v789
    %1350 = vmatprep.subr.bf16.mxu0 %v774
    %1351 = vmatpush1.bf16.msra.mxu0 %v773
    %1352 = vmatprep.subr.bf16.mxu0 %v758
    %1353 = vmatpush1.bf16.msra.mxu0 %v757
    %1354 = vmatprep.subr.bf16.mxu0 %v742
    %1355 = vmatpush1.bf16.msra.mxu0 %v741
    %1356 = vmatprep.subr.bf16.mxu0 %v726
    %1357 = vmatpush1.bf16.msra.mxu0 %v725
    %1358 = vmatprep.subr.bf16.mxu0 %v710
    %1359 = vmatpush1.bf16.msra.mxu0 %v709
    %1360 = vmatprep.subr.bf16.mxu0 %v694
    %1361 = vmatpush1.bf16.msra.mxu0 %v693
    %1362 = vmatprep.subr.bf16.mxu0 0
    %1363 = vmatpush2.bf16.msra.mxu0 0
    %1364 = vmatprep.subr.bf16.mxu0 0
    %1365 = vmatpush2.bf16.msra.mxu0 0
    %1366 = vmatprep.subr.bf16.mxu0 0
    %1367 = vmatpush2.bf16.msra.mxu0 0
    %1368 = vmatprep.subr.bf16.mxu0 0
    %1369 = vmatpush2.bf16.msra.mxu0 0
    %1370 = vmatprep.subr.bf16.mxu0 0
    %1371 = vmatpush2.bf16.msra.mxu0 0
    %1372 = vmatprep.subr.bf16.mxu0 0
    %1373 = vmatpush2.bf16.msra.mxu0 0
    %1374 = vmatprep.subr.bf16.mxu0 %v1034
    %1375 = vmatpush2.bf16.msra.mxu0 %v1031
    %1376 = vmatprep.subr.bf16.mxu0 %v822
    %1377 = vmatpush2.bf16.msra.mxu0 %v821
    %1378 = vmatprep.mubr.bf16.mxu0 %v991
    %1379 = vmatmul.mubr.bf16.gmra.mxu0 %v217
    %v1380 = vpop.f32.mrf.mxu0
    %v1381 = vadd.f32 0.0, %v1380
    %v1382 = vpop.f32.mrf.mxu0
    %v1383 = vadd.f32 0.0, %v1382
    %v1384 = vpop.f32.mrf.mxu0
    %v1385 = vadd.f32 0.0, %v1384
    %v1386 = vpop.f32.mrf.mxu0
    %v1387 = vadd.f32 0.0, %v1386
    %1388 = vmatprep.mubr.bf16.mxu0 %v994
    %1389 = vmatmul.mubr.bf16.gmra.mxu0 %v219
    %v1390 = vpop.f32.mrf.mxu0
    %v1391 = vadd.f32 0.0, %v1390
    %v1392 = vpop.f32.mrf.mxu0
    %v1393 = vadd.f32 0.0, %v1392
    %v1394 = vpop.f32.mrf.mxu0
    %v1395 = vadd.f32 0.0, %v1394
    %v1396 = vpop.f32.mrf.mxu0
    %v1397 = vadd.f32 0.0, %v1396
    %1398 = vmatprep.mubr.bf16.mxu0 %v997
    %1399 = vmatmul.mubr.bf16.gmra.mxu0 %v221
    %v1400 = vpop.f32.mrf.mxu0
    %v1401 = vadd.f32 0.0, %v1400
    %v1402 = vpop.f32.mrf.mxu0
    %v1403 = vadd.f32 0.0, %v1402
    %v1404 = vpop.f32.mrf.mxu0
    %v1405 = vadd.f32 0.0, %v1404
    %v1406 = vpop.f32.mrf.mxu0
    %v1407 = vadd.f32 0.0, %v1406
    %1408 = vmatprep.mubr.bf16.mxu0 %v1000
    %1409 = vmatmul.mubr.bf16.gmra.mxu0 %v223
    %v1410 = vpop.f32.mrf.mxu0
    %v1411 = vadd.f32 0.0, %v1410
    %v1412 = vpop.f32.mrf.mxu0
    %v1413 = vadd.f32 0.0, %v1412
    %v1414 = vpop.f32.mrf.mxu0
    %v1415 = vadd.f32 0.0, %v1414
    %v1416 = vpop.f32.mrf.mxu0
    %v1417 = vadd.f32 0.0, %v1416
    %1418 = vdwg.mxu0
    %1419 = vmatprep.subr.bf16.mxu0 %v808
    %1420 = vmatpush1.bf16.msra.mxu0 %v807
    %1421 = vmatprep.subr.bf16.mxu0 %v792
    %1422 = vmatpush1.bf16.msra.mxu0 %v791
    %1423 = vmatprep.subr.bf16.mxu0 %v776
    %1424 = vmatpush1.bf16.msra.mxu0 %v775
    %1425 = vmatprep.subr.bf16.mxu0 %v760
    %1426 = vmatpush1.bf16.msra.mxu0 %v759
    %1427 = vmatprep.subr.bf16.mxu0 %v744
    %1428 = vmatpush1.bf16.msra.mxu0 %v743
    %1429 = vmatprep.subr.bf16.mxu0 %v728
    %1430 = vmatpush1.bf16.msra.mxu0 %v727
    %1431 = vmatprep.subr.bf16.mxu0 %v712
    %1432 = vmatpush1.bf16.msra.mxu0 %v711
    %1433 = vmatprep.subr.bf16.mxu0 %v696
    %1434 = vmatpush1.bf16.msra.mxu0 %v695
    %1435 = vmatprep.subr.bf16.mxu0 0
    %1436 = vmatpush2.bf16.msra.mxu0 0
    %1437 = vmatprep.subr.bf16.mxu0 0
    %1438 = vmatpush2.bf16.msra.mxu0 0
    %1439 = vmatprep.subr.bf16.mxu0 0
    %1440 = vmatpush2.bf16.msra.mxu0 0
    %1441 = vmatprep.subr.bf16.mxu0 0
    %1442 = vmatpush2.bf16.msra.mxu0 0
    %1443 = vmatprep.subr.bf16.mxu0 0
    %1444 = vmatpush2.bf16.msra.mxu0 0
    %1445 = vmatprep.subr.bf16.mxu0 0
    %1446 = vmatpush2.bf16.msra.mxu0 0
    %1447 = vmatprep.subr.bf16.mxu0 %v1040
    %1448 = vmatpush2.bf16.msra.mxu0 %v1037
    %1449 = vmatprep.subr.bf16.mxu0 %v824
    %1450 = vmatpush2.bf16.msra.mxu0 %v823
    %1451 = vmatprep.mubr.bf16.mxu0 %v991
    %1452 = vmatmul.mubr.bf16.gmra.mxu0 %v217
    %v1453 = vpop.f32.mrf.mxu0
    %v1454 = vadd.f32 0.0, %v1453
    %v1455 = vpop.f32.mrf.mxu0
    %v1456 = vadd.f32 0.0, %v1455
    %v1457 = vpop.f32.mrf.mxu0
    %v1458 = vadd.f32 0.0, %v1457
    %v1459 = vpop.f32.mrf.mxu0
    %v1460 = vadd.f32 0.0, %v1459
    %1461 = vmatprep.mubr.bf16.mxu0 %v994
    %1462 = vmatmul.mubr.bf16.gmra.mxu0 %v219
    %v1463 = vpop.f32.mrf.mxu0
    %v1464 = vadd.f32 0.0, %v1463
    %v1465 = vpop.f32.mrf.mxu0
    %v1466 = vadd.f32 0.0, %v1465
    %v1467 = vpop.f32.mrf.mxu0
    %v1468 = vadd.f32 0.0, %v1467
    %v1469 = vpop.f32.mrf.mxu0
    %v1470 = vadd.f32 0.0, %v1469
    %1471 = vmatprep.mubr.bf16.mxu0 %v997
    %1472 = vmatmul.mubr.bf16.gmra.mxu0 %v221
    %v1473 = vpop.f32.mrf.mxu0
    %v1474 = vadd.f32 0.0, %v1473
    %v1475 = vpop.f32.mrf.mxu0
    %v1476 = vadd.f32 0.0, %v1475
    %v1477 = vpop.f32.mrf.mxu0
    %v1478 = vadd.f32 0.0, %v1477
    %v1479 = vpop.f32.mrf.mxu0
    %v1480 = vadd.f32 0.0, %v1479
    %1481 = vmatprep.mubr.bf16.mxu0 %v1000
    %1482 = vmatmul.mubr.bf16.gmra.mxu0 %v223
    %v1483 = vpop.f32.mrf.mxu0
    %v1484 = vadd.f32 0.0, %v1483
    %v1485 = vpop.f32.mrf.mxu0
    %v1486 = vadd.f32 0.0, %v1485
    %v1487 = vpop.f32.mrf.mxu0
    %v1488 = vadd.f32 0.0, %v1487
    %v1489 = vpop.f32.mrf.mxu0
    %v1490 = vadd.f32 0.0, %v1489
    %1491 = vdwg.mxu0
    %1492 = vmatprep.subr.bf16.mxu0 %v810
    %1493 = vmatpush1.bf16.msra.mxu0 %v809
    %1494 = vmatprep.subr.bf16.mxu0 %v794
    %1495 = vmatpush1.bf16.msra.mxu0 %v793
    %1496 = vmatprep.subr.bf16.mxu0 %v778
    %1497 = vmatpush1.bf16.msra.mxu0 %v777
    %1498 = vmatprep.subr.bf16.mxu0 %v762
    %1499 = vmatpush1.bf16.msra.mxu0 %v761
    %1500 = vmatprep.subr.bf16.mxu0 %v746
    %1501 = vmatpush1.bf16.msra.mxu0 %v745
    %1502 = vmatprep.subr.bf16.mxu0 %v730
    %1503 = vmatpush1.bf16.msra.mxu0 %v729
    %1504 = vmatprep.subr.bf16.mxu0 %v714
    %1505 = vmatpush1.bf16.msra.mxu0 %v713
    %1506 = vmatprep.subr.bf16.mxu0 %v698
    %1507 = vmatpush1.bf16.msra.mxu0 %v697
    %1508 = vmatprep.subr.bf16.mxu0 0
    %1509 = vmatpush2.bf16.msra.mxu0 0
    %1510 = vmatprep.subr.bf16.mxu0 0
    %1511 = vmatpush2.bf16.msra.mxu0 0
    %1512 = vmatprep.subr.bf16.mxu0 0
    %1513 = vmatpush2.bf16.msra.mxu0 0
    %1514 = vmatprep.subr.bf16.mxu0 0
    %1515 = vmatpush2.bf16.msra.mxu0 0
    %1516 = vmatprep.subr.bf16.mxu0 0
    %1517 = vmatpush2.bf16.msra.mxu0 0
    %1518 = vmatprep.subr.bf16.mxu0 0
    %1519 = vmatpush2.bf16.msra.mxu0 0
    %1520 = vmatprep.subr.bf16.mxu0 %v1046
    %1521 = vmatpush2.bf16.msra.mxu0 %v1043
    %1522 = vmatprep.subr.bf16.mxu0 %v826
    %1523 = vmatpush2.bf16.msra.mxu0 %v825
    %1524 = vmatprep.mubr.bf16.mxu0 %v991
    %1525 = vmatmul.mubr.bf16.gmra.mxu0 %v217
    %v1526 = vpop.f32.mrf.mxu0
    %v1527 = vadd.f32 0.0, %v1526
    %v1528 = vpop.f32.mrf.mxu0
    %v1529 = vadd.f32 0.0, %v1528
    %v1530 = vpop.f32.mrf.mxu0
    %v1531 = vadd.f32 0.0, %v1530
    %v1532 = vpop.f32.mrf.mxu0
    %v1533 = vadd.f32 0.0, %v1532
    %1534 = vmatprep.mubr.bf16.mxu0 %v994
    %1535 = vmatmul.mubr.bf16.gmra.mxu0 %v219
    %v1536 = vpop.f32.mrf.mxu0
    %v1537 = vadd.f32 0.0, %v1536
    %v1538 = vpop.f32.mrf.mxu0
    %v1539 = vadd.f32 0.0, %v1538
    %v1540 = vpop.f32.mrf.mxu0
    %v1541 = vadd.f32 0.0, %v1540
    %v1542 = vpop.f32.mrf.mxu0
    %v1543 = vadd.f32 0.0, %v1542
    %1544 = vmatprep.mubr.bf16.mxu0 %v997
    %1545 = vmatmul.mubr.bf16.gmra.mxu0 %v221
    %v1546 = vpop.f32.mrf.mxu0
    %v1547 = vadd.f32 0.0, %v1546
    %v1548 = vpop.f32.mrf.mxu0
    %v1549 = vadd.f32 0.0, %v1548
    %v1550 = vpop.f32.mrf.mxu0
    %v1551 = vadd.f32 0.0, %v1550
    %v1552 = vpop.f32.mrf.mxu0
    %v1553 = vadd.f32 0.0, %v1552
    %1554 = vmatprep.mubr.bf16.mxu0 %v1000
    %1555 = vmatmul.mubr.bf16.gmra.mxu0 %v223
    %v1556 = vpop.f32.mrf.mxu0
    %v1557 = vadd.f32 0.0, %v1556
    %v1558 = vpop.f32.mrf.mxu0
    %v1559 = vadd.f32 0.0, %v1558
    %v1560 = vpop.f32.mrf.mxu0
    %v1561 = vadd.f32 0.0, %v1560
    %v1562 = vpop.f32.mrf.mxu0
    %v1563 = vadd.f32 0.0, %v1562
    %1564 = vdwg.mxu0
    %1565 = vmatprep.subr.bf16.mxu0 %v812
    %1566 = vmatpush1.bf16.msra.mxu0 %v811
    %1567 = vmatprep.subr.bf16.mxu0 %v796
    %1568 = vmatpush1.bf16.msra.mxu0 %v795
    %1569 = vmatprep.subr.bf16.mxu0 %v780
    %1570 = vmatpush1.bf16.msra.mxu0 %v779
    %1571 = vmatprep.subr.bf16.mxu0 %v764
    %1572 = vmatpush1.bf16.msra.mxu0 %v763
    %1573 = vmatprep.subr.bf16.mxu0 %v748
    %1574 = vmatpush1.bf16.msra.mxu0 %v747
    %1575 = vmatprep.subr.bf16.mxu0 %v732
    %1576 = vmatpush1.bf16.msra.mxu0 %v731
    %1577 = vmatprep.subr.bf16.mxu0 %v716
    %1578 = vmatpush1.bf16.msra.mxu0 %v715
    %1579 = vmatprep.subr.bf16.mxu0 %v700
    %1580 = vmatpush1.bf16.msra.mxu0 %v699
    %1581 = vmatprep.subr.bf16.mxu0 0
    %1582 = vmatpush2.bf16.msra.mxu0 0
    %1583 = vmatprep.subr.bf16.mxu0 0
    %1584 = vmatpush2.bf16.msra.mxu0 0
    %1585 = vmatprep.subr.bf16.mxu0 0
    %1586 = vmatpush2.bf16.msra.mxu0 0
    %1587 = vmatprep.subr.bf16.mxu0 0
    %1588 = vmatpush2.bf16.msra.mxu0 0
    %1589 = vmatprep.subr.bf16.mxu0 0
    %1590 = vmatpush2.bf16.msra.mxu0 0
    %1591 = vmatprep.subr.bf16.mxu0 0
    %1592 = vmatpush2.bf16.msra.mxu0 0
    %1593 = vmatprep.subr.bf16.mxu0 %v1052
    %1594 = vmatpush2.bf16.msra.mxu0 %v1049
    %1595 = vmatprep.subr.bf16.mxu0 %v828
    %1596 = vmatpush2.bf16.msra.mxu0 %v827
    %1597 = vmatprep.mubr.bf16.mxu0 %v991
    %1598 = vmatmul.mubr.bf16.gmra.mxu0 %v217
    %v1599 = vpop.f32.mrf.mxu0
    %v1600 = vadd.f32 0.0, %v1599
    %v1601 = vpop.f32.mrf.mxu0
    %v1602 = vadd.f32 0.0, %v1601
    %v1603 = vpop.f32.mrf.mxu0
    %v1604 = vadd.f32 0.0, %v1603
    %v1605 = vpop.f32.mrf.mxu0
    %v1606 = vadd.f32 0.0, %v1605
    %1607 = vmatprep.mubr.bf16.mxu0 %v994
    %1608 = vmatmul.mubr.bf16.gmra.mxu0 %v219
    %v1609 = vpop.f32.mrf.mxu0
    %v1610 = vadd.f32 0.0, %v1609
    %v1611 = vpop.f32.mrf.mxu0
    %v1612 = vadd.f32 0.0, %v1611
    %v1613 = vpop.f32.mrf.mxu0
    %v1614 = vadd.f32 0.0, %v1613
    %v1615 = vpop.f32.mrf.mxu0
    %v1616 = vadd.f32 0.0, %v1615
    %1617 = vmatprep.mubr.bf16.mxu0 %v997
    %1618 = vmatmul.mubr.bf16.gmra.mxu0 %v221
    %v1619 = vpop.f32.mrf.mxu0
    %v1620 = vadd.f32 0.0, %v1619
    %v1621 = vpop.f32.mrf.mxu0
    %v1622 = vadd.f32 0.0, %v1621
    %v1623 = vpop.f32.mrf.mxu0
    %v1624 = vadd.f32 0.0, %v1623
    %v1625 = vpop.f32.mrf.mxu0
    %v1626 = vadd.f32 0.0, %v1625
    %1627 = vmatprep.mubr.bf16.mxu0 %v1000
    %1628 = vmatmul.mubr.bf16.gmra.mxu0 %v223
    %v1629 = vpop.f32.mrf.mxu0
    %v1630 = vadd.f32 0.0, %v1629
    %v1631 = vpop.f32.mrf.mxu0
    %v1632 = vadd.f32 0.0, %v1631
    %v1633 = vpop.f32.mrf.mxu0
    %v1634 = vadd.f32 0.0, %v1633
    %v1635 = vpop.f32.mrf.mxu0
    %v1636 = vadd.f32 0.0, %v1635
    %1637 = vdwg.mxu0
    %v1638 = vld [vmem:[%s2] sm:$0xff]
    %v1639 = vld [vmem:[%s2 + $0x8] sm:$0xff]
    %v1640 = vld [vmem:[%s2 + $0x10] sm:$0xff]
    %v1641 = vld [vmem:[%s2 + $0x18] sm:$0xff]
    %v1642 = vld [vmem:[%s2 + $0x20] sm:$0xff]
    %v1643 = vld [vmem:[%s2 + $0x28] sm:$0xff]
    %v1644 = vld [vmem:[%s2 + $0x30] sm:$0xff]
    %v1645 = vld [vmem:[%s2 + $0x38] sm:$0xff]
    %v1646 = vld [vmem:[%s3] sm:$0xff]
    %v1647 = vld [vmem:[%s3 + $0x8] sm:$0xff]
    %v1648 = vld [vmem:[%s3 + $0x10] sm:$0xff]
    %v1649 = vld [vmem:[%s3 + $0x18] sm:$0xff]
    %v1650 = vld [vmem:[%s3 + $0x20] sm:$0xff]
    %v1651 = vld [vmem:[%s3 + $0x28] sm:$0xff]
    %v1652 = vld [vmem:[%s3 + $0x30] sm:$0xff]
    %v1653 = vld [vmem:[%s3 + $0x38] sm:$0xff]
    %v1654 = vadd.f32 %v1089, %v1091
    %v1655 = vadd.f32 %v1654, %v1162
    %v1656 = vadd.f32 %v1655, %v1164
    %v1657 = vadd.f32 %v1656, %v1235
    %v1658 = vadd.f32 %v1657, %v1237
    %v1659 = vadd.f32 %v1658, %v1308
    %v1660 = vadd.f32 %v1659, %v1310
    %v1661 = vadd.f32 %v1660, %v1381
    %v1662 = vadd.f32 %v1661, %v1383
    %v1663 = vadd.f32 %v1662, %v1454
    %v1664 = vadd.f32 %v1663, %v1456
    %v1665 = vadd.f32 %v1664, %v1527
    %v1666 = vadd.f32 %v1665, %v1529
    %v1667 = vadd.f32 %v1666, %v1600
    %v1668 = vadd.f32 %v1667, %v1602
    %1669 = vadd.xlane.f32.xlu0 %v1668
    %v1670 = vpop.xlane.xlu0 %1669
    %v1671 = vadd.f32 %v1093, %v1095
    %v1672 = vadd.f32 %v1671, %v1166
    %v1673 = vadd.f32 %v1672, %v1168
    %v1674 = vadd.f32 %v1673, %v1239
    %v1675 = vadd.f32 %v1674, %v1241
    %v1676 = vadd.f32 %v1675, %v1312
    %v1677 = vadd.f32 %v1676, %v1314
    %v1678 = vadd.f32 %v1677, %v1385
    %v1679 = vadd.f32 %v1678, %v1387
    %v1680 = vadd.f32 %v1679, %v1458
    %v1681 = vadd.f32 %v1680, %v1460
    %v1682 = vadd.f32 %v1681, %v1531
    %v1683 = vadd.f32 %v1682, %v1533
    %v1684 = vadd.f32 %v1683, %v1604
    %v1685 = vadd.f32 %v1684, %v1606
    %1686 = vadd.xlane.f32.xlu0 %v1685
    %v1687 = vpop.xlane.xlu0 %1686
    %v1688 = vadd.f32 %v1099, %v1101
    %v1689 = vadd.f32 %v1688, %v1172
    %v1690 = vadd.f32 %v1689, %v1174
    %v1691 = vadd.f32 %v1690, %v1245
    %v1692 = vadd.f32 %v1691, %v1247
    %v1693 = vadd.f32 %v1692, %v1318
    %v1694 = vadd.f32 %v1693, %v1320
    %v1695 = vadd.f32 %v1694, %v1391
    %v1696 = vadd.f32 %v1695, %v1393
    %v1697 = vadd.f32 %v1696, %v1464
    %v1698 = vadd.f32 %v1697, %v1466
    %v1699 = vadd.f32 %v1698, %v1537
    %v1700 = vadd.f32 %v1699, %v1539
    %v1701 = vadd.f32 %v1700, %v1610
    %v1702 = vadd.f32 %v1701, %v1612
    %1703 = vadd.xlane.f32.xlu0 %v1702
    %v1704 = vpop.xlane.xlu0 %1703
    %v1705 = vadd.f32 %v1103, %v1105
    %v1706 = vadd.f32 %v1705, %v1176
    %v1707 = vadd.f32 %v1706, %v1178
    %v1708 = vadd.f32 %v1707, %v1249
    %v1709 = vadd.f32 %v1708, %v1251
    %v1710 = vadd.f32 %v1709, %v1322
    %v1711 = vadd.f32 %v1710, %v1324
    %v1712 = vadd.f32 %v1711, %v1395
    %v1713 = vadd.f32 %v1712, %v1397
    %v1714 = vadd.f32 %v1713, %v1468
    %v1715 = vadd.f32 %v1714, %v1470
    %v1716 = vadd.f32 %v1715, %v1541
    %v1717 = vadd.f32 %v1716, %v1543
    %v1718 = vadd.f32 %v1717, %v1614
    %v1719 = vadd.f32 %v1718, %v1616
    %1720 = vadd.xlane.f32.xlu0 %v1719
    %v1721 = vpop.xlane.xlu0 %1720
    %v1722 = vadd.f32 %v1109, %v1111
    %v1723 = vadd.f32 %v1722, %v1182
    %v1724 = vadd.f32 %v1723, %v1184
    %v1725 = vadd.f32 %v1724, %v1255
    %v1726 = vadd.f32 %v1725, %v1257
    %v1727 = vadd.f32 %v1726, %v1328
    %v1728 = vadd.f32 %v1727, %v1330
    %v1729 = vadd.f32 %v1728, %v1401
    %v1730 = vadd.f32 %v1729, %v1403
    %v1731 = vadd.f32 %v1730, %v1474
    %v1732 = vadd.f32 %v1731, %v1476
    %v1733 = vadd.f32 %v1732, %v1547
    %v1734 = vadd.f32 %v1733, %v1549
    %v1735 = vadd.f32 %v1734, %v1620
    %v1736 = vadd.f32 %v1735, %v1622
    %1737 = vadd.xlane.f32.xlu0 %v1736
    %v1738 = vpop.xlane.xlu0 %1737
    %v1739 = vadd.f32 %v1113, %v1115
    %v1740 = vadd.f32 %v1739, %v1186
    %v1741 = vadd.f32 %v1740, %v1188
    %v1742 = vadd.f32 %v1741, %v1259
    %v1743 = vadd.f32 %v1742, %v1261
    %v1744 = vadd.f32 %v1743, %v1332
    %v1745 = vadd.f32 %v1744, %v1334
    %v1746 = vadd.f32 %v1745, %v1405
    %v1747 = vadd.f32 %v1746, %v1407
    %v1748 = vadd.f32 %v1747, %v1478
    %v1749 = vadd.f32 %v1748, %v1480
    %v1750 = vadd.f32 %v1749, %v1551
    %v1751 = vadd.f32 %v1750, %v1553
    %v1752 = vadd.f32 %v1751, %v1624
    %v1753 = vadd.f32 %v1752, %v1626
    %1754 = vadd.xlane.f32.xlu0 %v1753
    %v1755 = vpop.xlane.xlu0 %1754
    %v1756 = vadd.f32 %v1119, %v1121
    %v1757 = vadd.f32 %v1756, %v1192
    %v1758 = vadd.f32 %v1757, %v1194
    %v1759 = vadd.f32 %v1758, %v1265
    %v1760 = vadd.f32 %v1759, %v1267
    %v1761 = vadd.f32 %v1760, %v1338
    %v1762 = vadd.f32 %v1761, %v1340
    %v1763 = vadd.f32 %v1762, %v1411
    %v1764 = vadd.f32 %v1763, %v1413
    %v1765 = vadd.f32 %v1764, %v1484
    %v1766 = vadd.f32 %v1765, %v1486
    %v1767 = vadd.f32 %v1766, %v1557
    %v1768 = vadd.f32 %v1767, %v1559
    %v1769 = vadd.f32 %v1768, %v1630
    %v1770 = vadd.f32 %v1769, %v1632
    %1771 = vadd.xlane.f32.xlu0 %v1770
    %v1772 = vpop.xlane.xlu0 %1771
    %v1773 = vadd.f32 %v1123, %v1125
    %v1774 = vadd.f32 %v1773, %v1196
    %v1775 = vadd.f32 %v1774, %v1198
    %v1776 = vadd.f32 %v1775, %v1269
    %v1777 = vadd.f32 %v1776, %v1271
    %v1778 = vadd.f32 %v1777, %v1342
    %v1779 = vadd.f32 %v1778, %v1344
    %v1780 = vadd.f32 %v1779, %v1415
    %v1781 = vadd.f32 %v1780, %v1417
    %v1782 = vadd.f32 %v1781, %v1488
    %v1783 = vadd.f32 %v1782, %v1490
    %v1784 = vadd.f32 %v1783, %v1561
    %v1785 = vadd.f32 %v1784, %v1563
    %v1786 = vadd.f32 %v1785, %v1634
    %v1787 = vadd.f32 %v1786, %v1636
    %1788 = vadd.xlane.f32.xlu0 %v1787
    %v1789 = vpop.xlane.xlu0 %1788
    %v1790 = vmul.f32 %v1670, 0.00048828125
    %v1791 = vmul.f32 %v1687, 0.00048828125
    %v1792 = vmul.f32 %v1704, 0.00048828125
    %v1793 = vmul.f32 %v1721, 0.00048828125
    %v1794 = vmul.f32 %v1738, 0.00048828125
    %v1795 = vmul.f32 %v1755, 0.00048828125
    %v1796 = vmul.f32 %v1772, 0.00048828125
    %v1797 = vmul.f32 %v1789, 0.00048828125
    %v1798 = vsub.f32 %v1089, %v1790
    %v1799 = vsub.f32 %v1091, %v1790
    %v1800 = vsub.f32 %v1162, %v1790
    %v1801 = vsub.f32 %v1164, %v1790
    %v1802 = vsub.f32 %v1235, %v1790
    %v1803 = vsub.f32 %v1237, %v1790
    %v1804 = vsub.f32 %v1308, %v1790
    %v1805 = vsub.f32 %v1310, %v1790
    %v1806 = vsub.f32 %v1381, %v1790
    %v1807 = vsub.f32 %v1383, %v1790
    %v1808 = vsub.f32 %v1454, %v1790
    %v1809 = vsub.f32 %v1456, %v1790
    %v1810 = vsub.f32 %v1527, %v1790
    %v1811 = vsub.f32 %v1529, %v1790
    %v1812 = vsub.f32 %v1600, %v1790
    %v1813 = vsub.f32 %v1602, %v1790
    %v1814 = vsub.f32 %v1093, %v1791
    %v1815 = vsub.f32 %v1095, %v1791
    %v1816 = vsub.f32 %v1166, %v1791
    %v1817 = vsub.f32 %v1168, %v1791
    %v1818 = vsub.f32 %v1239, %v1791
    %v1819 = vsub.f32 %v1241, %v1791
    %v1820 = vsub.f32 %v1312, %v1791
    %v1821 = vsub.f32 %v1314, %v1791
    %v1822 = vsub.f32 %v1385, %v1791
    %v1823 = vsub.f32 %v1387, %v1791
    %v1824 = vsub.f32 %v1458, %v1791
    %v1825 = vsub.f32 %v1460, %v1791
    %v1826 = vsub.f32 %v1531, %v1791
    %v1827 = vsub.f32 %v1533, %v1791
    %v1828 = vsub.f32 %v1604, %v1791
    %v1829 = vsub.f32 %v1606, %v1791
    %v1830 = vsub.f32 %v1099, %v1792
    %v1831 = vsub.f32 %v1101, %v1792
    %v1832 = vsub.f32 %v1172, %v1792
    %v1833 = vsub.f32 %v1174, %v1792
    %v1834 = vsub.f32 %v1245, %v1792
    %v1835 = vsub.f32 %v1247, %v1792
    %v1836 = vsub.f32 %v1318, %v1792
    %v1837 = vsub.f32 %v1320, %v1792
    %v1838 = vsub.f32 %v1391, %v1792
    %v1839 = vsub.f32 %v1393, %v1792
    %v1840 = vsub.f32 %v1464, %v1792
    %v1841 = vsub.f32 %v1466, %v1792
    %v1842 = vsub.f32 %v1537, %v1792
    %v1843 = vsub.f32 %v1539, %v1792
    %v1844 = vsub.f32 %v1610, %v1792
    %v1845 = vsub.f32 %v1612, %v1792
    %v1846 = vsub.f32 %v1103, %v1793
    %v1847 = vsub.f32 %v1105, %v1793
    %v1848 = vsub.f32 %v1176, %v1793
    %v1849 = vsub.f32 %v1178, %v1793
    %v1850 = vsub.f32 %v1249, %v1793
    %v1851 = vsub.f32 %v1251, %v1793
    %v1852 = vsub.f32 %v1322, %v1793
    %v1853 = vsub.f32 %v1324, %v1793
    %v1854 = vsub.f32 %v1395, %v1793
    %v1855 = vsub.f32 %v1397, %v1793
    %v1856 = vsub.f32 %v1468, %v1793
    %v1857 = vsub.f32 %v1470, %v1793
    %v1858 = vsub.f32 %v1541, %v1793
    %v1859 = vsub.f32 %v1543, %v1793
    %v1860 = vsub.f32 %v1614, %v1793
    %v1861 = vsub.f32 %v1616, %v1793
    %v1862 = vsub.f32 %v1109, %v1794
    %v1863 = vsub.f32 %v1111, %v1794
    %v1864 = vsub.f32 %v1182, %v1794
    %v1865 = vsub.f32 %v1184, %v1794
    %v1866 = vsub.f32 %v1255, %v1794
    %v1867 = vsub.f32 %v1257, %v1794
    %v1868 = vsub.f32 %v1328, %v1794
    %v1869 = vsub.f32 %v1330, %v1794
    %v1870 = vsub.f32 %v1401, %v1794
    %v1871 = vsub.f32 %v1403, %v1794
    %v1872 = vsub.f32 %v1474, %v1794
    %v1873 = vsub.f32 %v1476, %v1794
    %v1874 = vsub.f32 %v1547, %v1794
    %v1875 = vsub.f32 %v1549, %v1794
    %v1876 = vsub.f32 %v1620, %v1794
    %v1877 = vsub.f32 %v1622, %v1794
    %v1878 = vsub.f32 %v1113, %v1795
    %v1879 = vsub.f32 %v1115, %v1795
    %v1880 = vsub.f32 %v1186, %v1795
    %v1881 = vsub.f32 %v1188, %v1795
    %v1882 = vsub.f32 %v1259, %v1795
    %v1883 = vsub.f32 %v1261, %v1795
    %v1884 = vsub.f32 %v1332, %v1795
    %v1885 = vsub.f32 %v1334, %v1795
    %v1886 = vsub.f32 %v1405, %v1795
    %v1887 = vsub.f32 %v1407, %v1795
    %v1888 = vsub.f32 %v1478, %v1795
    %v1889 = vsub.f32 %v1480, %v1795
    %v1890 = vsub.f32 %v1551, %v1795
    %v1891 = vsub.f32 %v1553, %v1795
    %v1892 = vsub.f32 %v1624, %v1795
    %v1893 = vsub.f32 %v1626, %v1795
    %v1894 = vsub.f32 %v1119, %v1796
    %v1895 = vsub.f32 %v1121, %v1796
    %v1896 = vsub.f32 %v1192, %v1796
    %v1897 = vsub.f32 %v1194, %v1796
    %v1898 = vsub.f32 %v1265, %v1796
    %v1899 = vsub.f32 %v1267, %v1796
    %v1900 = vsub.f32 %v1338, %v1796
    %v1901 = vsub.f32 %v1340, %v1796
    %v1902 = vsub.f32 %v1411, %v1796
    %v1903 = vsub.f32 %v1413, %v1796
    %v1904 = vsub.f32 %v1484, %v1796
    %v1905 = vsub.f32 %v1486, %v1796
    %v1906 = vsub.f32 %v1557, %v1796
    %v1907 = vsub.f32 %v1559, %v1796
    %v1908 = vsub.f32 %v1630, %v1796
    %v1909 = vsub.f32 %v1632, %v1796
    %v1910 = vsub.f32 %v1123, %v1797
    %v1911 = vsub.f32 %v1125, %v1797
    %v1912 = vsub.f32 %v1196, %v1797
    %v1913 = vsub.f32 %v1198, %v1797
    %v1914 = vsub.f32 %v1269, %v1797
    %v1915 = vsub.f32 %v1271, %v1797
    %v1916 = vsub.f32 %v1342, %v1797
    %v1917 = vsub.f32 %v1344, %v1797
    %v1918 = vsub.f32 %v1415, %v1797
    %v1919 = vsub.f32 %v1417, %v1797
    %v1920 = vsub.f32 %v1488, %v1797
    %v1921 = vsub.f32 %v1490, %v1797
    %v1922 = vsub.f32 %v1561, %v1797
    %v1923 = vsub.f32 %v1563, %v1797
    %v1924 = vsub.f32 %v1634, %v1797
    %v1925 = vsub.f32 %v1636, %v1797
    %v1926 = vmul.f32 %v1798, %v1798
    %v1927 = vmul.f32 %v1799, %v1799
    %v1928 = vmul.f32 %v1800, %v1800
    %v1929 = vmul.f32 %v1801, %v1801
    %v1930 = vmul.f32 %v1802, %v1802
    %v1931 = vmul.f32 %v1803, %v1803
    %v1932 = vmul.f32 %v1804, %v1804
    %v1933 = vmul.f32 %v1805, %v1805
    %v1934 = vmul.f32 %v1806, %v1806
    %v1935 = vmul.f32 %v1807, %v1807
    %v1936 = vmul.f32 %v1808, %v1808
    %v1937 = vmul.f32 %v1809, %v1809
    %v1938 = vmul.f32 %v1810, %v1810
    %v1939 = vmul.f32 %v1811, %v1811
    %v1940 = vmul.f32 %v1812, %v1812
    %v1941 = vmul.f32 %v1813, %v1813
    %v1942 = vmul.f32 %v1814, %v1814
    %v1943 = vmul.f32 %v1815, %v1815
    %v1944 = vmul.f32 %v1816, %v1816
    %v1945 = vmul.f32 %v1817, %v1817
    %v1946 = vmul.f32 %v1818, %v1818
    %v1947 = vmul.f32 %v1819, %v1819
    %v1948 = vmul.f32 %v1820, %v1820
    %v1949 = vmul.f32 %v1821, %v1821
    %v1950 = vmul.f32 %v1822, %v1822
    %v1951 = vmul.f32 %v1823, %v1823
    %v1952 = vmul.f32 %v1824, %v1824
    %v1953 = vmul.f32 %v1825, %v1825
    %v1954 = vmul.f32 %v1826, %v1826
    %v1955 = vmul.f32 %v1827, %v1827
    %v1956 = vmul.f32 %v1828, %v1828
    %v1957 = vmul.f32 %v1829, %v1829
    %v1958 = vmul.f32 %v1830, %v1830
    %v1959 = vmul.f32 %v1831, %v1831
    %v1960 = vmul.f32 %v1832, %v1832
    %v1961 = vmul.f32 %v1833, %v1833
    %v1962 = vmul.f32 %v1834, %v1834
    %v1963 = vmul.f32 %v1835, %v1835
    %v1964 = vmul.f32 %v1836, %v1836
    %v1965 = vmul.f32 %v1837, %v1837
    %v1966 = vmul.f32 %v1838, %v1838
    %v1967 = vmul.f32 %v1839, %v1839
    %v1968 = vmul.f32 %v1840, %v1840
    %v1969 = vmul.f32 %v1841, %v1841
    %v1970 = vmul.f32 %v1842, %v1842
    %v1971 = vmul.f32 %v1843, %v1843
    %v1972 = vmul.f32 %v1844, %v1844
    %v1973 = vmul.f32 %v1845, %v1845
    %v1974 = vmul.f32 %v1846, %v1846
    %v1975 = vmul.f32 %v1847, %v1847
    %v1976 = vmul.f32 %v1848, %v1848
    %v1977 = vmul.f32 %v1849, %v1849
    %v1978 = vmul.f32 %v1850, %v1850
    %v1979 = vmul.f32 %v1851, %v1851
    %v1980 = vmul.f32 %v1852, %v1852
    %v1981 = vmul.f32 %v1853, %v1853
    %v1982 = vmul.f32 %v1854, %v1854
    %v1983 = vmul.f32 %v1855, %v1855
    %v1984 = vmul.f32 %v1856, %v1856
    %v1985 = vmul.f32 %v1857, %v1857
    %v1986 = vmul.f32 %v1858, %v1858
    %v1987 = vmul.f32 %v1859, %v1859
    %v1988 = vmul.f32 %v1860, %v1860
    %v1989 = vmul.f32 %v1861, %v1861
    %v1990 = vmul.f32 %v1862, %v1862
    %v1991 = vmul.f32 %v1863, %v1863
    %v1992 = vmul.f32 %v1864, %v1864
    %v1993 = vmul.f32 %v1865, %v1865
    %v1994 = vmul.f32 %v1866, %v1866
    %v1995 = vmul.f32 %v1867, %v1867
    %v1996 = vmul.f32 %v1868, %v1868
    %v1997 = vmul.f32 %v1869, %v1869
    %v1998 = vmul.f32 %v1870, %v1870
    %v1999 = vmul.f32 %v1871, %v1871
    %v2000 = vmul.f32 %v1872, %v1872
    %v2001 = vmul.f32 %v1873, %v1873
    %v2002 = vmul.f32 %v1874, %v1874
    %v2003 = vmul.f32 %v1875, %v1875
    %v2004 = vmul.f32 %v1876, %v1876
    %v2005 = vmul.f32 %v1877, %v1877
    %v2006 = vmul.f32 %v1878, %v1878
    %v2007 = vmul.f32 %v1879, %v1879
    %v2008 = vmul.f32 %v1880, %v1880
    %v2009 = vmul.f32 %v1881, %v1881
    %v2010 = vmul.f32 %v1882, %v1882
    %v2011 = vmul.f32 %v1883, %v1883
    %v2012 = vmul.f32 %v1884, %v1884
    %v2013 = vmul.f32 %v1885, %v1885
    %v2014 = vmul.f32 %v1886, %v1886
    %v2015 = vmul.f32 %v1887, %v1887
    %v2016 = vmul.f32 %v1888, %v1888
    %v2017 = vmul.f32 %v1889, %v1889
    %v2018 = vmul.f32 %v1890, %v1890
    %v2019 = vmul.f32 %v1891, %v1891
    %v2020 = vmul.f32 %v1892, %v1892
    %v2021 = vmul.f32 %v1893, %v1893
    %v2022 = vmul.f32 %v1894, %v1894
    %v2023 = vmul.f32 %v1895, %v1895
    %v2024 = vmul.f32 %v1896, %v1896
    %v2025 = vmul.f32 %v1897, %v1897
    %v2026 = vmul.f32 %v1898, %v1898
    %v2027 = vmul.f32 %v1899, %v1899
    %v2028 = vmul.f32 %v1900, %v1900
    %v2029 = vmul.f32 %v1901, %v1901
    %v2030 = vmul.f32 %v1902, %v1902
    %v2031 = vmul.f32 %v1903, %v1903
    %v2032 = vmul.f32 %v1904, %v1904
    %v2033 = vmul.f32 %v1905, %v1905
    %v2034 = vmul.f32 %v1906, %v1906
    %v2035 = vmul.f32 %v1907, %v1907
    %v2036 = vmul.f32 %v1908, %v1908
    %v2037 = vmul.f32 %v1909, %v1909
    %v2038 = vmul.f32 %v1910, %v1910
    %v2039 = vmul.f32 %v1911, %v1911
    %v2040 = vmul.f32 %v1912, %v1912
    %v2041 = vmul.f32 %v1913, %v1913
    %v2042 = vmul.f32 %v1914, %v1914
    %v2043 = vmul.f32 %v1915, %v1915
    %v2044 = vmul.f32 %v1916, %v1916
    %v2045 = vmul.f32 %v1917, %v1917
    %v2046 = vmul.f32 %v1918, %v1918
    %v2047 = vmul.f32 %v1919, %v1919
    %v2048 = vmul.f32 %v1920, %v1920
    %v2049 = vmul.f32 %v1921, %v1921
    %v2050 = vmul.f32 %v1922, %v1922
    %v2051 = vmul.f32 %v1923, %v1923
    %v2052 = vmul.f32 %v1924, %v1924
    %v2053 = vmul.f32 %v1925, %v1925
    %v2054 = vadd.f32 %v1926, %v1927
    %v2055 = vadd.f32 %v2054, %v1928
    %v2056 = vadd.f32 %v2055, %v1929
    %v2057 = vadd.f32 %v2056, %v1930
    %v2058 = vadd.f32 %v2057, %v1931
    %v2059 = vadd.f32 %v2058, %v1932
    %v2060 = vadd.f32 %v2059, %v1933
    %v2061 = vadd.f32 %v2060, %v1934
    %v2062 = vadd.f32 %v2061, %v1935
    %v2063 = vadd.f32 %v2062, %v1936
    %v2064 = vadd.f32 %v2063, %v1937
    %v2065 = vadd.f32 %v2064, %v1938
    %v2066 = vadd.f32 %v2065, %v1939
    %v2067 = vadd.f32 %v2066, %v1940
    %v2068 = vadd.f32 %v2067, %v1941
    %2069 = vadd.xlane.f32.xlu0 %v2068
    %v2070 = vpop.xlane.xlu0 %2069
    %v2071 = vadd.f32 %v1942, %v1943
    %v2072 = vadd.f32 %v2071, %v1944
    %v2073 = vadd.f32 %v2072, %v1945
    %v2074 = vadd.f32 %v2073, %v1946
    %v2075 = vadd.f32 %v2074, %v1947
    %v2076 = vadd.f32 %v2075, %v1948
    %v2077 = vadd.f32 %v2076, %v1949
    %v2078 = vadd.f32 %v2077, %v1950
    %v2079 = vadd.f32 %v2078, %v1951
    %v2080 = vadd.f32 %v2079, %v1952
    %v2081 = vadd.f32 %v2080, %v1953
    %v2082 = vadd.f32 %v2081, %v1954
    %v2083 = vadd.f32 %v2082, %v1955
    %v2084 = vadd.f32 %v2083, %v1956
    %v2085 = vadd.f32 %v2084, %v1957
    %2086 = vadd.xlane.f32.xlu0 %v2085
    %v2087 = vpop.xlane.xlu0 %2086
    %v2088 = vadd.f32 %v1958, %v1959
    %v2089 = vadd.f32 %v2088, %v1960
    %v2090 = vadd.f32 %v2089, %v1961
    %v2091 = vadd.f32 %v2090, %v1962
    %v2092 = vadd.f32 %v2091, %v1963
    %v2093 = vadd.f32 %v2092, %v1964
    %v2094 = vadd.f32 %v2093, %v1965
    %v2095 = vadd.f32 %v2094, %v1966
    %v2096 = vadd.f32 %v2095, %v1967
    %v2097 = vadd.f32 %v2096, %v1968
    %v2098 = vadd.f32 %v2097, %v1969
    %v2099 = vadd.f32 %v2098, %v1970
    %v2100 = vadd.f32 %v2099, %v1971
    %v2101 = vadd.f32 %v2100, %v1972
    %v2102 = vadd.f32 %v2101, %v1973
    %2103 = vadd.xlane.f32.xlu0 %v2102
    %v2104 = vpop.xlane.xlu0 %2103
    %v2105 = vadd.f32 %v1974, %v1975
    %v2106 = vadd.f32 %v2105, %v1976
    %v2107 = vadd.f32 %v2106, %v1977
    %v2108 = vadd.f32 %v2107, %v1978
    %v2109 = vadd.f32 %v2108, %v1979
    %v2110 = vadd.f32 %v2109, %v1980
    %v2111 = vadd.f32 %v2110, %v1981
    %v2112 = vadd.f32 %v2111, %v1982
    %v2113 = vadd.f32 %v2112, %v1983
    %v2114 = vadd.f32 %v2113, %v1984
    %v2115 = vadd.f32 %v2114, %v1985
    %v2116 = vadd.f32 %v2115, %v1986
    %v2117 = vadd.f32 %v2116, %v1987
    %v2118 = vadd.f32 %v2117, %v1988
    %v2119 = vadd.f32 %v2118, %v1989
    %2120 = vadd.xlane.f32.xlu0 %v2119
    %v2121 = vpop.xlane.xlu0 %2120
    %v2122 = vadd.f32 %v1990, %v1991
    %v2123 = vadd.f32 %v2122, %v1992
    %v2124 = vadd.f32 %v2123, %v1993
    %v2125 = vadd.f32 %v2124, %v1994
    %v2126 = vadd.f32 %v2125, %v1995
    %v2127 = vadd.f32 %v2126, %v1996
    %v2128 = vadd.f32 %v2127, %v1997
    %v2129 = vadd.f32 %v2128, %v1998
    %v2130 = vadd.f32 %v2129, %v1999
    %v2131 = vadd.f32 %v2130, %v2000
    %v2132 = vadd.f32 %v2131, %v2001
    %v2133 = vadd.f32 %v2132, %v2002
    %v2134 = vadd.f32 %v2133, %v2003
    %v2135 = vadd.f32 %v2134, %v2004
    %v2136 = vadd.f32 %v2135, %v2005
    %2137 = vadd.xlane.f32.xlu0 %v2136
    %v2138 = vpop.xlane.xlu0 %2137
    %v2139 = vadd.f32 %v2006, %v2007
    %v2140 = vadd.f32 %v2139, %v2008
    %v2141 = vadd.f32 %v2140, %v2009
    %v2142 = vadd.f32 %v2141, %v2010
    %v2143 = vadd.f32 %v2142, %v2011
    %v2144 = vadd.f32 %v2143, %v2012
    %v2145 = vadd.f32 %v2144, %v2013
    %v2146 = vadd.f32 %v2145, %v2014
    %v2147 = vadd.f32 %v2146, %v2015
    %v2148 = vadd.f32 %v2147, %v2016
    %v2149 = vadd.f32 %v2148, %v2017
    %v2150 = vadd.f32 %v2149, %v2018
    %v2151 = vadd.f32 %v2150, %v2019
    %v2152 = vadd.f32 %v2151, %v2020
    %v2153 = vadd.f32 %v2152, %v2021
    %2154 = vadd.xlane.f32.xlu0 %v2153
    %v2155 = vpop.xlane.xlu0 %2154
    %v2156 = vadd.f32 %v2022, %v2023
    %v2157 = vadd.f32 %v2156, %v2024
    %v2158 = vadd.f32 %v2157, %v2025
    %v2159 = vadd.f32 %v2158, %v2026
    %v2160 = vadd.f32 %v2159, %v2027
    %v2161 = vadd.f32 %v2160, %v2028
    %v2162 = vadd.f32 %v2161, %v2029
    %v2163 = vadd.f32 %v2162, %v2030
    %v2164 = vadd.f32 %v2163, %v2031
    %v2165 = vadd.f32 %v2164, %v2032
    %v2166 = vadd.f32 %v2165, %v2033
    %v2167 = vadd.f32 %v2166, %v2034
    %v2168 = vadd.f32 %v2167, %v2035
    %v2169 = vadd.f32 %v2168, %v2036
    %v2170 = vadd.f32 %v2169, %v2037
    %2171 = vadd.xlane.f32.xlu0 %v2170
    %v2172 = vpop.xlane.xlu0 %2171
    %v2173 = vadd.f32 %v2038, %v2039
    %v2174 = vadd.f32 %v2173, %v2040
    %v2175 = vadd.f32 %v2174, %v2041
    %v2176 = vadd.f32 %v2175, %v2042
    %v2177 = vadd.f32 %v2176, %v2043
    %v2178 = vadd.f32 %v2177, %v2044
    %v2179 = vadd.f32 %v2178, %v2045
    %v2180 = vadd.f32 %v2179, %v2046
    %v2181 = vadd.f32 %v2180, %v2047
    %v2182 = vadd.f32 %v2181, %v2048
    %v2183 = vadd.f32 %v2182, %v2049
    %v2184 = vadd.f32 %v2183, %v2050
    %v2185 = vadd.f32 %v2184, %v2051
    %v2186 = vadd.f32 %v2185, %v2052
    %v2187 = vadd.f32 %v2186, %v2053
    %2188 = vadd.xlane.f32.xlu0 %v2187
    %v2189 = vpop.xlane.xlu0 %2188
    %v2190 = vmul.f32 %v2070, 0.00048828125
    %v2191 = vmul.f32 %v2087, 0.00048828125
    %v2192 = vmul.f32 %v2104, 0.00048828125
    %v2193 = vmul.f32 %v2121, 0.00048828125
    %v2194 = vmul.f32 %v2138, 0.00048828125
    %v2195 = vmul.f32 %v2155, 0.00048828125
    %v2196 = vmul.f32 %v2172, 0.00048828125
    %v2197 = vmul.f32 %v2189, 0.00048828125
    %v2198 = vadd.f32 %v2190, 1e-05
    %v2199 = vadd.f32 %v2191, 1e-05
    %v2200 = vadd.f32 %v2192, 1e-05
    %v2201 = vadd.f32 %v2193, 1e-05
    %v2202 = vadd.f32 %v2194, 1e-05
    %v2203 = vadd.f32 %v2195, 1e-05
    %v2204 = vadd.f32 %v2196, 1e-05
    %v2205 = vadd.f32 %v2197, 1e-05
    %v2206 = vrsqrt.pop %v2198
    %v2207 = vrsqrt.pop %v2199
    %v2208 = vrsqrt.pop %v2200
    %v2209 = vrsqrt.pop %v2201
    %v2210 = vrsqrt.pop %v2202
    %v2211 = vrsqrt.pop %v2203
    %v2212 = vrsqrt.pop %v2204
    %v2213 = vrsqrt.pop %v2205
    %v2214 = vmul.f32 %v2206, %v1638
    %v2215 = vmul.f32 %v2207, %v1639
    %v2216 = vmul.f32 %v2208, %v1640
    %v2217 = vmul.f32 %v2209, %v1641
    %v2218 = vmul.f32 %v2210, %v1642
    %v2219 = vmul.f32 %v2211, %v1643
    %v2220 = vmul.f32 %v2212, %v1644
    %v2221 = vmul.f32 %v2213, %v1645
    %2223 = vset.pattern.permute.xlu0 0
    %2224 = vperm.xlu0 %2223, %v2214
    %v2225 = vpop.permute.xlu0 %2224
    %2228 = vset.pattern.permute.xlu0 0
    %2229 = vperm.xlu0 %2228, %v2215
    %v2230 = vpop.permute.xlu0 %2229
    %2233 = vset.pattern.permute.xlu0 0
    %2234 = vperm.xlu0 %2233, %v2216
    %v2235 = vpop.permute.xlu0 %2234
    %2238 = vset.pattern.permute.xlu0 0
    %2239 = vperm.xlu0 %2238, %v2217
    %v2240 = vpop.permute.xlu0 %2239
    %2243 = vset.pattern.permute.xlu0 0
    %2244 = vperm.xlu0 %2243, %v2218
    %v2245 = vpop.permute.xlu0 %2244
    %2248 = vset.pattern.permute.xlu0 0
    %2249 = vperm.xlu0 %2248, %v2219
    %v2250 = vpop.permute.xlu0 %2249
    %2253 = vset.pattern.permute.xlu0 0
    %2254 = vperm.xlu0 %2253, %v2220
    %v2255 = vpop.permute.xlu0 %2254
    %2258 = vset.pattern.permute.xlu0 0
    %2259 = vperm.xlu0 %2258, %v2221
    %v2260 = vpop.permute.xlu0 %2259
    %v2262 = vmul.f32 %v1798, %v2225
    %v2263 = vmul.f32 %v1799, %v2225
    %v2264 = vmul.f32 %v1800, %v2225
    %v2265 = vmul.f32 %v1801, %v2225
    %v2266 = vmul.f32 %v1802, %v2225
    %v2267 = vmul.f32 %v1803, %v2225
    %v2268 = vmul.f32 %v1804, %v2225
    %v2269 = vmul.f32 %v1805, %v2225
    %v2270 = vmul.f32 %v1806, %v2225
    %v2271 = vmul.f32 %v1807, %v2225
    %v2272 = vmul.f32 %v1808, %v2225
    %v2273 = vmul.f32 %v1809, %v2225
    %v2274 = vmul.f32 %v1810, %v2225
    %v2275 = vmul.f32 %v1811, %v2225
    %v2276 = vmul.f32 %v1812, %v2225
    %v2277 = vmul.f32 %v1813, %v2225
    %v2278 = vmul.f32 %v1814, %v2230
    %v2279 = vmul.f32 %v1815, %v2230
    %v2280 = vmul.f32 %v1816, %v2230
    %v2281 = vmul.f32 %v1817, %v2230
    %v2282 = vmul.f32 %v1818, %v2230
    %v2283 = vmul.f32 %v1819, %v2230
    %v2284 = vmul.f32 %v1820, %v2230
    %v2285 = vmul.f32 %v1821, %v2230
    %v2286 = vmul.f32 %v1822, %v2230
    %v2287 = vmul.f32 %v1823, %v2230
    %v2288 = vmul.f32 %v1824, %v2230
    %v2289 = vmul.f32 %v1825, %v2230
    %v2290 = vmul.f32 %v1826, %v2230
    %v2291 = vmul.f32 %v1827, %v2230
    %v2292 = vmul.f32 %v1828, %v2230
    %v2293 = vmul.f32 %v1829, %v2230
    %v2294 = vmul.f32 %v1830, %v2235
    %v2295 = vmul.f32 %v1831, %v2235
    %v2296 = vmul.f32 %v1832, %v2235
    %v2297 = vmul.f32 %v1833, %v2235
    %v2298 = vmul.f32 %v1834, %v2235
    %v2299 = vmul.f32 %v1835, %v2235
    %v2300 = vmul.f32 %v1836, %v2235
    %v2301 = vmul.f32 %v1837, %v2235
    %v2302 = vmul.f32 %v1838, %v2235
    %v2303 = vmul.f32 %v1839, %v2235
    %v2304 = vmul.f32 %v1840, %v2235
    %v2305 = vmul.f32 %v1841, %v2235
    %v2306 = vmul.f32 %v1842, %v2235
    %v2307 = vmul.f32 %v1843, %v2235
    %v2308 = vmul.f32 %v1844, %v2235
    %v2309 = vmul.f32 %v1845, %v2235
    %v2310 = vmul.f32 %v1846, %v2240
    %v2311 = vmul.f32 %v1847, %v2240
    %v2312 = vmul.f32 %v1848, %v2240
    %v2313 = vmul.f32 %v1849, %v2240
    %v2314 = vmul.f32 %v1850, %v2240
    %v2315 = vmul.f32 %v1851, %v2240
    %v2316 = vmul.f32 %v1852, %v2240
    %v2317 = vmul.f32 %v1853, %v2240
    %v2318 = vmul.f32 %v1854, %v2240
    %v2319 = vmul.f32 %v1855, %v2240
    %v2320 = vmul.f32 %v1856, %v2240
    %v2321 = vmul.f32 %v1857, %v2240
    %v2322 = vmul.f32 %v1858, %v2240
    %v2323 = vmul.f32 %v1859, %v2240
    %v2324 = vmul.f32 %v1860, %v2240
    %v2325 = vmul.f32 %v1861, %v2240
    %v2326 = vmul.f32 %v1862, %v2245
    %v2327 = vmul.f32 %v1863, %v2245
    %v2328 = vmul.f32 %v1864, %v2245
    %v2329 = vmul.f32 %v1865, %v2245
    %v2330 = vmul.f32 %v1866, %v2245
    %v2331 = vmul.f32 %v1867, %v2245
    %v2332 = vmul.f32 %v1868, %v2245
    %v2333 = vmul.f32 %v1869, %v2245
    %v2334 = vmul.f32 %v1870, %v2245
    %v2335 = vmul.f32 %v1871, %v2245
    %v2336 = vmul.f32 %v1872, %v2245
    %v2337 = vmul.f32 %v1873, %v2245
    %v2338 = vmul.f32 %v1874, %v2245
    %v2339 = vmul.f32 %v1875, %v2245
    %v2340 = vmul.f32 %v1876, %v2245
    %v2341 = vmul.f32 %v1877, %v2245
    %v2342 = vmul.f32 %v1878, %v2250
    %v2343 = vmul.f32 %v1879, %v2250
    %v2344 = vmul.f32 %v1880, %v2250
    %v2345 = vmul.f32 %v1881, %v2250
    %v2346 = vmul.f32 %v1882, %v2250
    %v2347 = vmul.f32 %v1883, %v2250
    %v2348 = vmul.f32 %v1884, %v2250
    %v2349 = vmul.f32 %v1885, %v2250
    %v2350 = vmul.f32 %v1886, %v2250
    %v2351 = vmul.f32 %v1887, %v2250
    %v2352 = vmul.f32 %v1888, %v2250
    %v2353 = vmul.f32 %v1889, %v2250
    %v2354 = vmul.f32 %v1890, %v2250
    %v2355 = vmul.f32 %v1891, %v2250
    %v2356 = vmul.f32 %v1892, %v2250
    %v2357 = vmul.f32 %v1893, %v2250
    %v2358 = vmul.f32 %v1894, %v2255
    %v2359 = vmul.f32 %v1895, %v2255
    %v2360 = vmul.f32 %v1896, %v2255
    %v2361 = vmul.f32 %v1897, %v2255
    %v2362 = vmul.f32 %v1898, %v2255
    %v2363 = vmul.f32 %v1899, %v2255
    %v2364 = vmul.f32 %v1900, %v2255
    %v2365 = vmul.f32 %v1901, %v2255
    %v2366 = vmul.f32 %v1902, %v2255
    %v2367 = vmul.f32 %v1903, %v2255
    %v2368 = vmul.f32 %v1904, %v2255
    %v2369 = vmul.f32 %v1905, %v2255
    %v2370 = vmul.f32 %v1906, %v2255
    %v2371 = vmul.f32 %v1907, %v2255
    %v2372 = vmul.f32 %v1908, %v2255
    %v2373 = vmul.f32 %v1909, %v2255
    %v2374 = vmul.f32 %v1910, %v2260
    %v2375 = vmul.f32 %v1911, %v2260
    %v2376 = vmul.f32 %v1912, %v2260
    %v2377 = vmul.f32 %v1913, %v2260
    %v2378 = vmul.f32 %v1914, %v2260
    %v2379 = vmul.f32 %v1915, %v2260
    %v2380 = vmul.f32 %v1916, %v2260
    %v2381 = vmul.f32 %v1917, %v2260
    %v2382 = vmul.f32 %v1918, %v2260
    %v2383 = vmul.f32 %v1919, %v2260
    %v2384 = vmul.f32 %v1920, %v2260
    %v2385 = vmul.f32 %v1921, %v2260
    %v2386 = vmul.f32 %v1922, %v2260
    %v2387 = vmul.f32 %v1923, %v2260
    %v2388 = vmul.f32 %v1924, %v2260
    %v2389 = vmul.f32 %v1925, %v2260
    %2391 = vset.pattern.permute.xlu0 0
    %2392 = vperm.xlu0 %2391, %v1646
    %v2393 = vpop.permute.xlu0 %2392
    %2396 = vset.pattern.permute.xlu0 0
    %2397 = vperm.xlu0 %2396, %v1647
    %v2398 = vpop.permute.xlu0 %2397
    %2401 = vset.pattern.permute.xlu0 0
    %2402 = vperm.xlu0 %2401, %v1648
    %v2403 = vpop.permute.xlu0 %2402
    %2406 = vset.pattern.permute.xlu0 0
    %2407 = vperm.xlu0 %2406, %v1649
    %v2408 = vpop.permute.xlu0 %2407
    %2411 = vset.pattern.permute.xlu0 0
    %2412 = vperm.xlu0 %2411, %v1650
    %v2413 = vpop.permute.xlu0 %2412
    %2416 = vset.pattern.permute.xlu0 0
    %2417 = vperm.xlu0 %2416, %v1651
    %v2418 = vpop.permute.xlu0 %2417
    %2421 = vset.pattern.permute.xlu0 0
    %2422 = vperm.xlu0 %2421, %v1652
    %v2423 = vpop.permute.xlu0 %2422
    %2426 = vset.pattern.permute.xlu0 0
    %2427 = vperm.xlu0 %2426, %v1653
    %v2428 = vpop.permute.xlu0 %2427
    %v2430 = vadd.f32 %v2262, %v2393
    %v2431 = vadd.f32 %v2263, %v2393
    %v2432 = vadd.f32 %v2264, %v2393
    %v2433 = vadd.f32 %v2265, %v2393
    %v2434 = vadd.f32 %v2266, %v2393
    %v2435 = vadd.f32 %v2267, %v2393
    %v2436 = vadd.f32 %v2268, %v2393
    %v2437 = vadd.f32 %v2269, %v2393
    %v2438 = vadd.f32 %v2270, %v2393
    %v2439 = vadd.f32 %v2271, %v2393
    %v2440 = vadd.f32 %v2272, %v2393
    %v2441 = vadd.f32 %v2273, %v2393
    %v2442 = vadd.f32 %v2274, %v2393
    %v2443 = vadd.f32 %v2275, %v2393
    %v2444 = vadd.f32 %v2276, %v2393
    %v2445 = vadd.f32 %v2277, %v2393
    %v2446 = vadd.f32 %v2278, %v2398
    %v2447 = vadd.f32 %v2279, %v2398
    %v2448 = vadd.f32 %v2280, %v2398
    %v2449 = vadd.f32 %v2281, %v2398
    %v2450 = vadd.f32 %v2282, %v2398
    %v2451 = vadd.f32 %v2283, %v2398
    %v2452 = vadd.f32 %v2284, %v2398
    %v2453 = vadd.f32 %v2285, %v2398
    %v2454 = vadd.f32 %v2286, %v2398
    %v2455 = vadd.f32 %v2287, %v2398
    %v2456 = vadd.f32 %v2288, %v2398
    %v2457 = vadd.f32 %v2289, %v2398
    %v2458 = vadd.f32 %v2290, %v2398
    %v2459 = vadd.f32 %v2291, %v2398
    %v2460 = vadd.f32 %v2292, %v2398
    %v2461 = vadd.f32 %v2293, %v2398
    %v2462 = vadd.f32 %v2294, %v2403
    %v2463 = vadd.f32 %v2295, %v2403
    %v2464 = vadd.f32 %v2296, %v2403
    %v2465 = vadd.f32 %v2297, %v2403
    %v2466 = vadd.f32 %v2298, %v2403
    %v2467 = vadd.f32 %v2299, %v2403
    %v2468 = vadd.f32 %v2300, %v2403
    %v2469 = vadd.f32 %v2301, %v2403
    %v2470 = vadd.f32 %v2302, %v2403
    %v2471 = vadd.f32 %v2303, %v2403
    %v2472 = vadd.f32 %v2304, %v2403
    %v2473 = vadd.f32 %v2305, %v2403
    %v2474 = vadd.f32 %v2306, %v2403
    %v2475 = vadd.f32 %v2307, %v2403
    %v2476 = vadd.f32 %v2308, %v2403
    %v2477 = vadd.f32 %v2309, %v2403
    %v2478 = vadd.f32 %v2310, %v2408
    %v2479 = vadd.f32 %v2311, %v2408
    %v2480 = vadd.f32 %v2312, %v2408
    %v2481 = vadd.f32 %v2313, %v2408
    %v2482 = vadd.f32 %v2314, %v2408
    %v2483 = vadd.f32 %v2315, %v2408
    %v2484 = vadd.f32 %v2316, %v2408
    %v2485 = vadd.f32 %v2317, %v2408
    %v2486 = vadd.f32 %v2318, %v2408
    %v2487 = vadd.f32 %v2319, %v2408
    %v2488 = vadd.f32 %v2320, %v2408
    %v2489 = vadd.f32 %v2321, %v2408
    %v2490 = vadd.f32 %v2322, %v2408
    %v2491 = vadd.f32 %v2323, %v2408
    %v2492 = vadd.f32 %v2324, %v2408
    %v2493 = vadd.f32 %v2325, %v2408
    %v2494 = vadd.f32 %v2326, %v2413
    %v2495 = vadd.f32 %v2327, %v2413
    %v2496 = vadd.f32 %v2328, %v2413
    %v2497 = vadd.f32 %v2329, %v2413
    %v2498 = vadd.f32 %v2330, %v2413
    %v2499 = vadd.f32 %v2331, %v2413
    %v2500 = vadd.f32 %v2332, %v2413
    %v2501 = vadd.f32 %v2333, %v2413
    %v2502 = vadd.f32 %v2334, %v2413
    %v2503 = vadd.f32 %v2335, %v2413
    %v2504 = vadd.f32 %v2336, %v2413
    %v2505 = vadd.f32 %v2337, %v2413
    %v2506 = vadd.f32 %v2338, %v2413
    %v2507 = vadd.f32 %v2339, %v2413
    %v2508 = vadd.f32 %v2340, %v2413
    %v2509 = vadd.f32 %v2341, %v2413
    %v2510 = vadd.f32 %v2342, %v2418
    %v2511 = vadd.f32 %v2343, %v2418
    %v2512 = vadd.f32 %v2344, %v2418
    %v2513 = vadd.f32 %v2345, %v2418
    %v2514 = vadd.f32 %v2346, %v2418
    %v2515 = vadd.f32 %v2347, %v2418
    %v2516 = vadd.f32 %v2348, %v2418
    %v2517 = vadd.f32 %v2349, %v2418
    %v2518 = vadd.f32 %v2350, %v2418
    %v2519 = vadd.f32 %v2351, %v2418
    %v2520 = vadd.f32 %v2352, %v2418
    %v2521 = vadd.f32 %v2353, %v2418
    %v2522 = vadd.f32 %v2354, %v2418
    %v2523 = vadd.f32 %v2355, %v2418
    %v2524 = vadd.f32 %v2356, %v2418
    %v2525 = vadd.f32 %v2357, %v2418
    %v2526 = vadd.f32 %v2358, %v2423
    %v2527 = vadd.f32 %v2359, %v2423
    %v2528 = vadd.f32 %v2360, %v2423
    %v2529 = vadd.f32 %v2361, %v2423
    %v2530 = vadd.f32 %v2362, %v2423
    %v2531 = vadd.f32 %v2363, %v2423
    %v2532 = vadd.f32 %v2364, %v2423
    %v2533 = vadd.f32 %v2365, %v2423
    %v2534 = vadd.f32 %v2366, %v2423
    %v2535 = vadd.f32 %v2367, %v2423
    %v2536 = vadd.f32 %v2368, %v2423
    %v2537 = vadd.f32 %v2369, %v2423
    %v2538 = vadd.f32 %v2370, %v2423
    %v2539 = vadd.f32 %v2371, %v2423
    %v2540 = vadd.f32 %v2372, %v2423
    %v2541 = vadd.f32 %v2373, %v2423
    %v2542 = vadd.f32 %v2374, %v2428
    %v2543 = vadd.f32 %v2375, %v2428
    %v2544 = vadd.f32 %v2376, %v2428
    %v2545 = vadd.f32 %v2377, %v2428
    %v2546 = vadd.f32 %v2378, %v2428
    %v2547 = vadd.f32 %v2379, %v2428
    %v2548 = vadd.f32 %v2380, %v2428
    %v2549 = vadd.f32 %v2381, %v2428
    %v2550 = vadd.f32 %v2382, %v2428
    %v2551 = vadd.f32 %v2383, %v2428
    %v2552 = vadd.f32 %v2384, %v2428
    %v2553 = vadd.f32 %v2385, %v2428
    %v2554 = vadd.f32 %v2386, %v2428
    %v2555 = vadd.f32 %v2387, %v2428
    %v2556 = vadd.f32 %v2388, %v2428
    %v2557 = vadd.f32 %v2389, %v2428
    %v2558 = vmax.f32 %v2430, 0.0
    %v2559 = vmax.f32 %v2431, 0.0
    %v2560 = vmax.f32 %v2432, 0.0
    %v2561 = vmax.f32 %v2433, 0.0
    %v2562 = vmax.f32 %v2434, 0.0
    %v2563 = vmax.f32 %v2435, 0.0
    %v2564 = vmax.f32 %v2436, 0.0
    %v2565 = vmax.f32 %v2437, 0.0
    %v2566 = vmax.f32 %v2438, 0.0
    %v2567 = vmax.f32 %v2439, 0.0
    %v2568 = vmax.f32 %v2440, 0.0
    %v2569 = vmax.f32 %v2441, 0.0
    %v2570 = vmax.f32 %v2442, 0.0
    %v2571 = vmax.f32 %v2443, 0.0
    %v2572 = vmax.f32 %v2444, 0.0
    %v2573 = vmax.f32 %v2445, 0.0
    %v2574 = vmax.f32 %v2446, 0.0
    %v2575 = vmax.f32 %v2447, 0.0
    %v2576 = vmax.f32 %v2448, 0.0
    %v2577 = vmax.f32 %v2449, 0.0
    %v2578 = vmax.f32 %v2450, 0.0
    %v2579 = vmax.f32 %v2451, 0.0
    %v2580 = vmax.f32 %v2452, 0.0
    %v2581 = vmax.f32 %v2453, 0.0
    %v2582 = vmax.f32 %v2454, 0.0
    %v2583 = vmax.f32 %v2455, 0.0
    %v2584 = vmax.f32 %v2456, 0.0
    %v2585 = vmax.f32 %v2457, 0.0
    %v2586 = vmax.f32 %v2458, 0.0
    %v2587 = vmax.f32 %v2459, 0.0
    %v2588 = vmax.f32 %v2460, 0.0
    %v2589 = vmax.f32 %v2461, 0.0
    %v2590 = vmax.f32 %v2462, 0.0
    %v2591 = vmax.f32 %v2463, 0.0
    %v2592 = vmax.f32 %v2464, 0.0
    %v2593 = vmax.f32 %v2465, 0.0
    %v2594 = vmax.f32 %v2466, 0.0
    %v2595 = vmax.f32 %v2467, 0.0
    %v2596 = vmax.f32 %v2468, 0.0
    %v2597 = vmax.f32 %v2469, 0.0
    %v2598 = vmax.f32 %v2470, 0.0
    %v2599 = vmax.f32 %v2471, 0.0
    %v2600 = vmax.f32 %v2472, 0.0
    %v2601 = vmax.f32 %v2473, 0.0
    %v2602 = vmax.f32 %v2474, 0.0
    %v2603 = vmax.f32 %v2475, 0.0
    %v2604 = vmax.f32 %v2476, 0.0
    %v2605 = vmax.f32 %v2477, 0.0
    %v2606 = vmax.f32 %v2478, 0.0
    %v2607 = vmax.f32 %v2479, 0.0
    %v2608 = vmax.f32 %v2480, 0.0
    %v2609 = vmax.f32 %v2481, 0.0
    %v2610 = vmax.f32 %v2482, 0.0
    %v2611 = vmax.f32 %v2483, 0.0
    %v2612 = vmax.f32 %v2484, 0.0
    %v2613 = vmax.f32 %v2485, 0.0
    %v2614 = vmax.f32 %v2486, 0.0
    %v2615 = vmax.f32 %v2487, 0.0
    %v2616 = vmax.f32 %v2488, 0.0
    %v2617 = vmax.f32 %v2489, 0.0
    %v2618 = vmax.f32 %v2490, 0.0
    %v2619 = vmax.f32 %v2491, 0.0
    %v2620 = vmax.f32 %v2492, 0.0
    %v2621 = vmax.f32 %v2493, 0.0
    %v2622 = vmax.f32 %v2494, 0.0
    %v2623 = vmax.f32 %v2495, 0.0
    %v2624 = vmax.f32 %v2496, 0.0
    %v2625 = vmax.f32 %v2497, 0.0
    %v2626 = vmax.f32 %v2498, 0.0
    %v2627 = vmax.f32 %v2499, 0.0
    %v2628 = vmax.f32 %v2500, 0.0
    %v2629 = vmax.f32 %v2501, 0.0
    %v2630 = vmax.f32 %v2502, 0.0
    %v2631 = vmax.f32 %v2503, 0.0
    %v2632 = vmax.f32 %v2504, 0.0
    %v2633 = vmax.f32 %v2505, 0.0
    %v2634 = vmax.f32 %v2506, 0.0
    %v2635 = vmax.f32 %v2507, 0.0
    %v2636 = vmax.f32 %v2508, 0.0
    %v2637 = vmax.f32 %v2509, 0.0
    %v2638 = vmax.f32 %v2510, 0.0
    %v2639 = vmax.f32 %v2511, 0.0
    %v2640 = vmax.f32 %v2512, 0.0
    %v2641 = vmax.f32 %v2513, 0.0
    %v2642 = vmax.f32 %v2514, 0.0
    %v2643 = vmax.f32 %v2515, 0.0
    %v2644 = vmax.f32 %v2516, 0.0
    %v2645 = vmax.f32 %v2517, 0.0
    %v2646 = vmax.f32 %v2518, 0.0
    %v2647 = vmax.f32 %v2519, 0.0
    %v2648 = vmax.f32 %v2520, 0.0
    %v2649 = vmax.f32 %v2521, 0.0
    %v2650 = vmax.f32 %v2522, 0.0
    %v2651 = vmax.f32 %v2523, 0.0
    %v2652 = vmax.f32 %v2524, 0.0
    %v2653 = vmax.f32 %v2525, 0.0
    %v2654 = vmax.f32 %v2526, 0.0
    %v2655 = vmax.f32 %v2527, 0.0
    %v2656 = vmax.f32 %v2528, 0.0
    %v2657 = vmax.f32 %v2529, 0.0
    %v2658 = vmax.f32 %v2530, 0.0
    %v2659 = vmax.f32 %v2531, 0.0
    %v2660 = vmax.f32 %v2532, 0.0
    %v2661 = vmax.f32 %v2533, 0.0
    %v2662 = vmax.f32 %v2534, 0.0
    %v2663 = vmax.f32 %v2535, 0.0
    %v2664 = vmax.f32 %v2536, 0.0
    %v2665 = vmax.f32 %v2537, 0.0
    %v2666 = vmax.f32 %v2538, 0.0
    %v2667 = vmax.f32 %v2539, 0.0
    %v2668 = vmax.f32 %v2540, 0.0
    %v2669 = vmax.f32 %v2541, 0.0
    %v2670 = vmax.f32 %v2542, 0.0
    %v2671 = vmax.f32 %v2543, 0.0
    %v2672 = vmax.f32 %v2544, 0.0
    %v2673 = vmax.f32 %v2545, 0.0
    %v2674 = vmax.f32 %v2546, 0.0
    %v2675 = vmax.f32 %v2547, 0.0
    %v2676 = vmax.f32 %v2548, 0.0
    %v2677 = vmax.f32 %v2549, 0.0
    %v2678 = vmax.f32 %v2550, 0.0
    %v2679 = vmax.f32 %v2551, 0.0
    %v2680 = vmax.f32 %v2552, 0.0
    %v2681 = vmax.f32 %v2553, 0.0
    %v2682 = vmax.f32 %v2554, 0.0
    %v2683 = vmax.f32 %v2555, 0.0
    %v2684 = vmax.f32 %v2556, 0.0
    %v2685 = vmax.f32 %v2557, 0.0
    %2686 = vst [vmem:[#allocation5] sm:$0xff] %v2558
    %2687 = vst [vmem:[#allocation5 + $0x8] sm:$0xff] %v2559
    %2688 = vst [vmem:[#allocation5 + $0x10] sm:$0xff] %v2560
    %2689 = vst [vmem:[#allocation5 + $0x18] sm:$0xff] %v2561
    %2690 = vst [vmem:[#allocation5 + $0x20] sm:$0xff] %v2562
    %2691 = vst [vmem:[#allocation5 + $0x28] sm:$0xff] %v2563
    %2692 = vst [vmem:[#allocation5 + $0x30] sm:$0xff] %v2564
    %2693 = vst [vmem:[#allocation5 + $0x38] sm:$0xff] %v2565
    %2694 = vst [vmem:[#allocation5 + $0x40] sm:$0xff] %v2566
    %2695 = vst [vmem:[#allocation5 + $0x48] sm:$0xff] %v2567
    %2696 = vst [vmem:[#allocation5 + $0x50] sm:$0xff] %v2568
    %2697 = vst [vmem:[#allocation5 + $0x58] sm:$0xff] %v2569
    %2698 = vst [vmem:[#allocation5 + $0x60] sm:$0xff] %v2570
    %2699 = vst [vmem:[#allocation5 + $0x68] sm:$0xff] %v2571
    %2700 = vst [vmem:[#allocation5 + $0x70] sm:$0xff] %v2572
    %2701 = vst [vmem:[#allocation5 + $0x78] sm:$0xff] %v2573
    %2702 = vst [vmem:[#allocation5 + $0x80] sm:$0xff] %v2574
    %2703 = vst [vmem:[#allocation5 + $0x88] sm:$0xff] %v2575
    %2704 = vst [vmem:[#allocation5 + $0x90] sm:$0xff] %v2576
    %2705 = vst [vmem:[#allocation5 + $0x98] sm:$0xff] %v2577
    %2706 = vst [vmem:[#allocation5 + $0xa0] sm:$0xff] %v2578
    %2707 = vst [vmem:[#allocation5 + $0xa8] sm:$0xff] %v2579
    %2708 = vst [vmem:[#allocation5 + $0xb0] sm:$0xff] %v2580
    %2709 = vst [vmem:[#allocation5 + $0xb8] sm:$0xff] %v2581
    %2710 = vst [vmem:[#allocation5 + $0xc0] sm:$0xff] %v2582
    %2711 = vst [vmem:[#allocation5 + $0xc8] sm:$0xff] %v2583
    %2712 = vst [vmem:[#allocation5 + $0xd0] sm:$0xff] %v2584
    %2713 = vst [vmem:[#allocation5 + $0xd8] sm:$0xff] %v2585
    %2714 = vst [vmem:[#allocation5 + $0xe0] sm:$0xff] %v2586
    %2715 = vst [vmem:[#allocation5 + $0xe8] sm:$0xff] %v2587
    %2716 = vst [vmem:[#allocation5 + $0xf0] sm:$0xff] %v2588
    %2717 = vst [vmem:[#allocation5 + $0xf8] sm:$0xff] %v2589
    %2718 = vst [vmem:[#allocation5 + $0x100] sm:$0xff] %v2590
    %2719 = vst [vmem:[#allocation5 + $0x108] sm:$0xff] %v2591
    %2720 = vst [vmem:[#allocation5 + $0x110] sm:$0xff] %v2592
    %2721 = vst [vmem:[#allocation5 + $0x118] sm:$0xff] %v2593
    %2722 = vst [vmem:[#allocation5 + $0x120] sm:$0xff] %v2594
    %2723 = vst [vmem:[#allocation5 + $0x128] sm:$0xff] %v2595
    %2724 = vst [vmem:[#allocation5 + $0x130] sm:$0xff] %v2596
    %2725 = vst [vmem:[#allocation5 + $0x138] sm:$0xff] %v2597
    %2726 = vst [vmem:[#allocation5 + $0x140] sm:$0xff] %v2598
    %2727 = vst [vmem:[#allocation5 + $0x148] sm:$0xff] %v2599
    %2728 = vst [vmem:[#allocation5 + $0x150] sm:$0xff] %v2600
    %2729 = vst [vmem:[#allocation5 + $0x158] sm:$0xff] %v2601
    %2730 = vst [vmem:[#allocation5 + $0x160] sm:$0xff] %v2602
    %2731 = vst [vmem:[#allocation5 + $0x168] sm:$0xff] %v2603
    %2732 = vst [vmem:[#allocation5 + $0x170] sm:$0xff] %v2604
    %2733 = vst [vmem:[#allocation5 + $0x178] sm:$0xff] %v2605
    %2734 = vst [vmem:[#allocation5 + $0x180] sm:$0xff] %v2606
    %2735 = vst [vmem:[#allocation5 + $0x188] sm:$0xff] %v2607
    %2736 = vst [vmem:[#allocation5 + $0x190] sm:$0xff] %v2608
    %2737 = vst [vmem:[#allocation5 + $0x198] sm:$0xff] %v2609
    %2738 = vst [vmem:[#allocation5 + $0x1a0] sm:$0xff] %v2610
    %2739 = vst [vmem:[#allocation5 + $0x1a8] sm:$0xff] %v2611
    %2740 = vst [vmem:[#allocation5 + $0x1b0] sm:$0xff] %v2612
    %2741 = vst [vmem:[#allocation5 + $0x1b8] sm:$0xff] %v2613
    %2742 = vst [vmem:[#allocation5 + $0x1c0] sm:$0xff] %v2614
    %2743 = vst [vmem:[#allocation5 + $0x1c8] sm:$0xff] %v2615
    %2744 = vst [vmem:[#allocation5 + $0x1d0] sm:$0xff] %v2616
    %2745 = vst [vmem:[#allocation5 + $0x1d8] sm:$0xff] %v2617
    %2746 = vst [vmem:[#allocation5 + $0x1e0] sm:$0xff] %v2618
    %2747 = vst [vmem:[#allocation5 + $0x1e8] sm:$0xff] %v2619
    %2748 = vst [vmem:[#allocation5 + $0x1f0] sm:$0xff] %v2620
    %2749 = vst [vmem:[#allocation5 + $0x1f8] sm:$0xff] %v2621
    %2750 = vst [vmem:[#allocation5 + $0x200] sm:$0xff] %v2622
    %2751 = vst [vmem:[#allocation5 + $0x208] sm:$0xff] %v2623
    %2752 = vst [vmem:[#allocation5 + $0x210] sm:$0xff] %v2624
    %2753 = vst [vmem:[#allocation5 + $0x218] sm:$0xff] %v2625
    %2754 = vst [vmem:[#allocation5 + $0x220] sm:$0xff] %v2626
    %2755 = vst [vmem:[#allocation5 + $0x228] sm:$0xff] %v2627
    %2756 = vst [vmem:[#allocation5 + $0x230] sm:$0xff] %v2628
    %2757 = vst [vmem:[#allocation5 + $0x238] sm:$0xff] %v2629
    %2758 = vst [vmem:[#allocation5 + $0x240] sm:$0xff] %v2630
    %2759 = vst [vmem:[#allocation5 + $0x248] sm:$0xff] %v2631
    %2760 = vst [vmem:[#allocation5 + $0x250] sm:$0xff] %v2632
    %2761 = vst [vmem:[#allocation5 + $0x258] sm:$0xff] %v2633
    %2762 = vst [vmem:[#allocation5 + $0x260] sm:$0xff] %v2634
    %2763 = vst [vmem:[#allocation5 + $0x268] sm:$0xff] %v2635
    %2764 = vst [vmem:[#allocation5 + $0x270] sm:$0xff] %v2636
    %2765 = vst [vmem:[#allocation5 + $0x278] sm:$0xff] %v2637
    %2766 = vst [vmem:[#allocation5 + $0x280] sm:$0xff] %v2638
    %2767 = vst [vmem:[#allocation5 + $0x288] sm:$0xff] %v2639
    %2768 = vst [vmem:[#allocation5 + $0x290] sm:$0xff] %v2640
    %2769 = vst [vmem:[#allocation5 + $0x298] sm:$0xff] %v2641
    %2770 = vst [vmem:[#allocation5 + $0x2a0] sm:$0xff] %v2642
    %2771 = vst [vmem:[#allocation5 + $0x2a8] sm:$0xff] %v2643
    %2772 = vst [vmem:[#allocation5 + $0x2b0] sm:$0xff] %v2644
    %2773 = vst [vmem:[#allocation5 + $0x2b8] sm:$0xff] %v2645
    %2774 = vst [vmem:[#allocation5 + $0x2c0] sm:$0xff] %v2646
    %2775 = vst [vmem:[#allocation5 + $0x2c8] sm:$0xff] %v2647
    %2776 = vst [vmem:[#allocation5 + $0x2d0] sm:$0xff] %v2648
    %2777 = vst [vmem:[#allocation5 + $0x2d8] sm:$0xff] %v2649
    %2778 = vst [vmem:[#allocation5 + $0x2e0] sm:$0xff] %v2650
    %2779 = vst [vmem:[#allocation5 + $0x2e8] sm:$0xff] %v2651
    %2780 = vst [vmem:[#allocation5 + $0x2f0] sm:$0xff] %v2652
    %2781 = vst [vmem:[#allocation5 + $0x2f8] sm:$0xff] %v2653
    %2782 = vst [vmem:[#allocation5 + $0x300] sm:$0xff] %v2654
    %2783 = vst [vmem:[#allocation5 + $0x308] sm:$0xff] %v2655
    %2784 = vst [vmem:[#allocation5 + $0x310] sm:$0xff] %v2656
    %2785 = vst [vmem:[#allocation5 + $0x318] sm:$0xff] %v2657
    %2786 = vst [vmem:[#allocation5 + $0x320] sm:$0xff] %v2658
    %2787 = vst [vmem:[#allocation5 + $0x328] sm:$0xff] %v2659
    %2788 = vst [vmem:[#allocation5 + $0x330] sm:$0xff] %v2660
    %2789 = vst [vmem:[#allocation5 + $0x338] sm:$0xff] %v2661
    %2790 = vst [vmem:[#allocation5 + $0x340] sm:$0xff] %v2662
    %2791 = vst [vmem:[#allocation5 + $0x348] sm:$0xff] %v2663
    %2792 = vst [vmem:[#allocation5 + $0x350] sm:$0xff] %v2664
    %2793 = vst [vmem:[#allocation5 + $0x358] sm:$0xff] %v2665
    %2794 = vst [vmem:[#allocation5 + $0x360] sm:$0xff] %v2666
    %2795 = vst [vmem:[#allocation5 + $0x368] sm:$0xff] %v2667
    %2796 = vst [vmem:[#allocation5 + $0x370] sm:$0xff] %v2668
    %2797 = vst [vmem:[#allocation5 + $0x378] sm:$0xff] %v2669
    %2798 = vst [vmem:[#allocation5 + $0x380] sm:$0xff] %v2670
    %2799 = vst [vmem:[#allocation5 + $0x388] sm:$0xff] %v2671
    %2800 = vst [vmem:[#allocation5 + $0x390] sm:$0xff] %v2672
    %2801 = vst [vmem:[#allocation5 + $0x398] sm:$0xff] %v2673
    %2802 = vst [vmem:[#allocation5 + $0x3a0] sm:$0xff] %v2674
    %2803 = vst [vmem:[#allocation5 + $0x3a8] sm:$0xff] %v2675
    %2804 = vst [vmem:[#allocation5 + $0x3b0] sm:$0xff] %v2676
    %2805 = vst [vmem:[#allocation5 + $0x3b8] sm:$0xff] %v2677
    %2806 = vst [vmem:[#allocation5 + $0x3c0] sm:$0xff] %v2678
    %2807 = vst [vmem:[#allocation5 + $0x3c8] sm:$0xff] %v2679
    %2808 = vst [vmem:[#allocation5 + $0x3d0] sm:$0xff] %v2680
    %2809 = vst [vmem:[#allocation5 + $0x3d8] sm:$0xff] %v2681
    %2810 = vst [vmem:[#allocation5 + $0x3e0] sm:$0xff] %v2682
    %2811 = vst [vmem:[#allocation5 + $0x3e8] sm:$0xff] %v2683
    %2812 = vst [vmem:[#allocation5 + $0x3f0] sm:$0xff] %v2684
    %2813 = vst [vmem:[#allocation5 + $0x3f8] sm:$0xff] %v2685
    // Predicated region
    $region22: #{tpu_custom_call.1} parent=1 // pred_check
      _
    $region23: #{tpu_custom_call.1} parent=1 // pred_check_branch
      %2815 = sbr.rel (0) target = $region25
    $region24: #{tpu_custom_call.1} parent=1 // pred_region
      %s2817 = ssub.s32 16384, 16384
      %2818 = vsyncadd [#allocation4], %s2817
      %s2819 = sshll.u32 [#allocation5], 4
      %s2820 = int_to_ptr.vmem [resolvable:$true] %s2819
      %2825 = dma.vmem_to_hbm [thread:$0]  %s2820, 16384, %s4, [#allocation4], 2048, 2048, 128
    $region25: #{tpu_custom_call.1} parent=1 // pred_fallthru
      _
    // Predicated region
    $region26: #{tpu_custom_call.1} parent=1 // pred_check
      _
    $region27: #{tpu_custom_call.1} parent=1 // pred_check_branch
      %2827 = sbr.rel (0) target = $region29
    $region28: #{tpu_custom_call.1} parent=1 // pred_region
      %2828 = dma.done [#allocation4], 16384
    $region29: #{tpu_custom_call.1} parent=1 // pred_fallthru
      _
    %2829 = vsyncpa [#allocation3], 1
    %2830 = vsyncpa [#allocation4], 1

</llo_original>
